<compile_context>
chip_gen: v7x
topology: tpu7x:2x2x1
jax: 0.10.0
libtpu: 0.0.40
codegen_flags: <defaults>
</compile_context>

<pallas_src>
import functools
import math

import jax
import jax.numpy as jnp
from jax.experimental import pallas as pl
from jax.experimental.pallas import tpu as pltpu


def _clip_loss_kernel(n_true, tm, tn, padded,
                      scale_ref, img_ref, txt_ref,
                      row_lse_ref, diag_ref, colm_ref, coll_ref,
                      row_m, row_l, ones_scr):
    i = pl.program_id(0)          # image (row) tile index  -- "parallel"
    j = pl.program_id(1)          # text  (col) tile index  -- "arbitrary"
    nj = pl.num_programs(1)
    scale = scale_ref[0, 0]

    # ---- per-row-tile init (runs for every i: safe under a megacore split) --
    @pl.when(j == 0)
    def _():
        row_m[...] = jnp.full_like(row_m, -jnp.inf)
        row_l[...] = jnp.zeros_like(row_l)
        diag_ref[...] = jnp.zeros_like(diag_ref)
        ones_scr[...] = jnp.ones_like(ones_scr)

    # ---- (TM, TN) logits tile on the MXU -------------------------------------
    # Contract last dims of both operands (no transposed text copy); features
    # stay in their incoming (bf16) dtype, accumulation is f32; logit_scale is
    # applied to the f32 tile (N^2 mults total, cheaper than rescaling features).
    z = jax.lax.dot_general(
        img_ref[...], txt_ref[...],
        dimension_numbers=(((1,), (1,)), ((), ())),
        preferred_element_type=jnp.float32) * scale            # (TM, TN) f32

    if padded:
        # Mask padded columns out of the row-LSE path and padded rows out of
        # the column-LSE path (padding only lives on the last tiles).
        gcol = j * tn + jax.lax.broadcasted_iota(jnp.int32, (tm, tn), 1)
        grow = i * tm + jax.lax.broadcasted_iota(jnp.int32, (tm, tn), 0)
        neg_inf = jnp.float32(-jnp.inf)
        z_row = jnp.where(gcol < n_true, z, neg_inf)
        z_col = jnp.where(grow < n_true, z, neg_inf)
    else:
        z_row = z
        z_col = z

    # ---- row-wise online logsumexp (CE of logits_per_image) ------------------
    bm = jnp.max(z_row, axis=1, keepdims=True)                 # (TM, 1)
    m_new = jnp.maximum(row_m[...], bm)
    e_row = jnp.exp(z_row - m_new)                             # (TM, TN)
    row_l[...] = (row_l[...] * jnp.exp(row_m[...] - m_new)
                  + jnp.sum(e_row, axis=1, keepdims=True))
    row_m[...] = m_new

    # ---- per-(row-tile, column) LSE partials (CE of logits_per_text) ---------
    bcm = jnp.max(z_col, axis=0, keepdims=True)                # (1, TN)
    if padded:
        # Guard: a fully padded row tile gives bcm = -inf and exp(-inf+inf)=NaN.
        bcm_safe = jnp.where(bcm == -jnp.inf, 0.0, bcm)
    else:
        bcm_safe = bcm
    e_col = jnp.exp(z_col - bcm_safe)                          # (TM, TN)
    # Column sum on the MXU (ones-vector matmul): 1/D of the main matmul and
    # avoids a cross-sublane XLU reduction.
    csum = jax.lax.dot_general(
        ones_scr[...], e_col,
        dimension_numbers=(((1,), (0,)), ((), ())),
        preferred_element_type=jnp.float32)                    # (1, TN)
    colm_ref[...] = bcm.reshape(1, 1, tn)
    coll_ref[...] = csum.reshape(1, 1, tn)

    # ---- diagonal (true-class logits), only on tiles the diagonal crosses ----
    @pl.when((i * tm < (j + 1) * tn) & (j * tn < (i + 1) * tm))
    def _():
        grow = i * tm + jax.lax.broadcasted_iota(jnp.int32, (tm, tn), 0)
        gcol = j * tn + jax.lax.broadcasted_iota(jnp.int32, (tm, tn), 1)
        diag_ref[...] = diag_ref[...] + jnp.sum(
            jnp.where(grow == gcol, z, 0.0), axis=1, keepdims=True)

    # ---- finalize this row tile's LSE on its last column step ----------------
    @pl.when(j == nj - 1)
    def _():
        row_lse_ref[...] = row_m[...] + jnp.log(row_l[...])


def _round_up(x, m):
    return (x + m - 1) // m * m


def _vmem_capacity_bytes():
    try:
        return int(pltpu.get_tpu_info().vmem_capacity_bytes)
    except Exception:
        return 64 * 1024 * 1024          # conservative default (v7x per-TC VMEM)


def _auto_block_m(n_pad, d, tn, itemsize, vmem_budget):
    """Largest TM <= 1024 dividing n_pad whose pipeline footprint fits VMEM.

    Arithmetic intensity of the stream is ~2*TM/itemsize flops per text byte,
    so TM = 1024 (bf16) clears the compute-bound threshold on v5e/v6e/v7x.
    """
    def footprint(tm):
        return (3 * tm * d * itemsize        # image tile (triple buffered)
                + 2 * tn * d * itemsize      # text tile  (double buffered)
                + 3 * tm * tn * 4            # z / e_row / e_col f32 tiles
                + 2 * (1 << 20))             # outputs, scratch, slack
    cands = [c for c in range(128, min(n_pad, 1024) + 1, 128) if n_pad % c == 0]
    tm = cands[0]
    for c in cands:                          # increasing -> keep largest fitting
        if footprint(c) <= vmem_budget:
            tm = c
    return tm


def clip_loss(image_features, text_features, logit_scale,
              block_m=None, block_n=None, cast_to_bf16=True):
    """ClipLoss.forward (world_size == 1).  image/text features: [N, D]."""
    n, d = image_features.shape
    assert text_features.shape == (n, d), "image/text batch & dim must match"

    if cast_to_bf16 and image_features.dtype == jnp.float32:
        # MXU-native operands; LSE math / matmul accumulation stay f32 in-kernel.
        image_features = image_features.astype(jnp.bfloat16)
        text_features = text_features.astype(jnp.bfloat16)
    itemsize = jnp.dtype(image_features.dtype).itemsize

    vmem_cap = _vmem_capacity_bytes()
    vmem_limit = int(min(vmem_cap * 3 // 4, 100 * (1 << 20)))

    # ---- tile / padding selection (generation- & dtype-aware) ---------------
    n128 = _round_up(n, 128)
    tn = block_n if block_n is not None else (256 if n128 % 256 == 0 else 128)
    if block_m is None:
        n_pad = _round_up(n, tn)
        tm = _auto_block_m(n_pad, d, tn, itemsize, int(vmem_limit * 0.8))
    else:
        tm = block_m
        n_pad = _round_up(n, math.lcm(tm, tn))
    assert n_pad % tm == 0 and n_pad % tn == 0
    ni, nj = n_pad // tm, n_pad // tn
    padded = n_pad != n

    img, txt = image_features, text_features
    if padded:
        img = jnp.pad(img, ((0, n_pad - n), (0, 0)))
        txt = jnp.pad(txt, ((0, n_pad - n), (0, 0)))
    scale = jnp.asarray(logit_scale, jnp.float32).reshape(1, 1)

    kernel = functools.partial(_clip_loss_kernel, n, tm, tn, padded)

    def _call(img_buffered):
        img_kwargs = dict(pipeline_mode=pl.Buffered(3)) if img_buffered else {}
        return pl.pallas_call(
            kernel,
            out_shape=(
                jax.ShapeDtypeStruct((n_pad, 1), jnp.float32),      # row LSE
                jax.ShapeDtypeStruct((n_pad, 1), jnp.float32),      # diag z_rr
                jax.ShapeDtypeStruct((ni, 1, n_pad), jnp.float32),  # col max part
                jax.ShapeDtypeStruct((ni, 1, n_pad), jnp.float32),  # col sum part
            ),
            grid=(ni, nj),
            in_specs=[
                pl.BlockSpec(memory_space=pltpu.MemorySpace.SMEM),   # logit_scale
                pl.BlockSpec((tm, d), lambda i, j: (i, 0), **img_kwargs),
                pl.BlockSpec((tn, d), lambda i, j: (j, 0)),
            ],
            out_specs=[
                pl.BlockSpec((tm, 1), lambda i, j: (i, 0)),
                pl.BlockSpec((tm, 1), lambda i, j: (i, 0)),
                pl.BlockSpec((1, 1, tn), lambda i, j: (i, 0, j)),
                pl.BlockSpec((1, 1, tn), lambda i, j: (i, 0, j)),
            ],
            scratch_shapes=[
                pltpu.VMEM((tm, 1), jnp.float32),    # row running max
                pltpu.VMEM((tm, 1), jnp.float32),    # row running sum
                pltpu.VMEM((1, tm), jnp.float32),    # ones for MXU column sum
            ],
            compiler_params=pltpu.CompilerParams(
                # Row-tile axis is independent (column-LSE partials are per-i
                # outputs merged in JAX) -> megacore splits it on v7x; the
                # column sweep is the sequential online-LSE axis.
                dimension_semantics=("parallel", "arbitrary"),
                vmem_limit_bytes=vmem_limit),
            cost_estimate=pl.CostEstimate(
                flops=2 * n_pad * n_pad * d,
                transcendentals=2 * n_pad * n_pad,
                # text is re-streamed once per row tile, image read once,
                # plus the small partial outputs.
                bytes_accessed=(ni + 1) * n_pad * d * itemsize
                + (2 * ni + 2) * n_pad * 4),
        )(scale, img, txt)

    try:
        row_lse_p, diag_p, colm_p, coll_p = _call(True)
    except Exception:
        # TODO(synk): pl.Buffered(3) image-tile triple-buffering unsupported on
        # this jax version; fall back to default double buffering.
        row_lse_p, diag_p, colm_p, coll_p = _call(False)

    # ---- tiny O(N * N/TM) epilogue: merge column partials, form the loss -----
    row_lse = row_lse_p[:n, 0]
    diag = diag_p[:n, 0]
    col_part = colm_p[:, 0, :n] + jnp.log(coll_p[:, 0, :n])     # (ni, n)
    col_lse = jax.nn.logsumexp(col_part, axis=0)                # (n,)
    return (jnp.sum(row_lse) + jnp.sum(col_lse) - 2.0 * jnp.sum(diag)) * (0.5 / n)


def clip_loss_ref(image_features, text_features, logit_scale):
    """Pure-JAX reference mirroring the PyTorch module (world_size == 1)."""
    img = image_features.astype(jnp.float32)
    txt = text_features.astype(jnp.float32)
    logits_per_image = logit_scale * img @ txt.T
    logits_per_text = logit_scale * txt @ img.T
    labels = jnp.arange(img.shape[0])

    def ce(logits):
        lse = jax.scipy.special.logsumexp(logits, axis=1)
        true = jnp.take_along_axis(logits, labels[:, None], axis=1)[:, 0]
        return jnp.mean(lse - true)

    return 0.5 * (ce(logits_per_image) + ce(logits_per_text))


if __name__ == "__main__":
    key = jax.random.PRNGKey(0)
    k1, k2 = jax.random.split(key)
    # Small shapes; N deliberately NOT a multiple of 128 to exercise the
    # padding / masking path, and two tilings to exercise the grid paths.
    N, D = 300, 128
    img = jax.random.normal(k1, (N, D), dtype=jnp.float32)
    txt = jax.random.normal(k2, (N, D), dtype=jnp.float32)
    # L2-normalize as CLIP does upstream (not required for loss semantics).
    img = img / jnp.linalg.norm(img, axis=-1, keepdims=True)
    txt = txt / jnp.linalg.norm(txt, axis=-1, keepdims=True)
    # Cast once here so the kernel and the reference see identical values.
    img = img.astype(jnp.bfloat16)
    txt = txt.astype(jnp.bfloat16)
    logit_scale = jnp.exp(jnp.log(jnp.float32(1.0 / 0.07)))

    # (a) 3x3 grid of square 128 tiles: exercises online row LSE across j, the
    #     cross-row-tile column-partial merge, padding masks, and the diagonal.
    loss_small = clip_loss(img, txt, logit_scale, block_m=128, block_n=128)
    # (b) auto tiling (rectangular TM x TN) chosen from the device VMEM info.
    loss_auto = clip_loss(img, txt, logit_scale)
    jax.block_until_ready((loss_small, loss_auto))

    ref = clip_loss_ref(img, txt, logit_scale)
    assert jnp.allclose(loss_small, ref, atol=1e-3, rtol=1e-3), (loss_small, ref)
    assert jnp.allclose(loss_auto, ref, atol=1e-3, rtol=1e-3), (loss_auto, ref)

    # TODO(synk): the world_size > 1 gather_features path (distributed
    # all_gather of features) is not implemented; only the single-device loss is.
    print("KERNEL_OK")
</pallas_src>

<mosaic_0001>
module attributes {stable_mosaic.version = 11 : i64} {
  func.func @_clip_loss_kernel(%arg0: i32, %arg1: i32, %arg2: memref<1x1xf32, #tpu.memory_space<smem>>, %arg3: memref<128x128xbf16, #tpu.memory_space<vmem>>, %arg4: memref<128x128xbf16, #tpu.memory_space<vmem>>, %arg5: memref<128x1xf32, #tpu.memory_space<vmem>>, %arg6: memref<128x1xf32, #tpu.memory_space<vmem>>, %arg7: memref<1x1x128xf32, #tpu.memory_space<vmem>>, %arg8: memref<1x1x128xf32, #tpu.memory_space<vmem>>, %arg9: memref<128x1xf32, #tpu.memory_space<vmem>>, %arg10: memref<128x1xf32, #tpu.memory_space<vmem>>, %arg11: memref<1x128xf32, #tpu.memory_space<vmem>>) attributes {dimension_semantics = [#tpu.dimension_semantics<parallel>, #tpu.dimension_semantics<arbitrary>], iteration_bounds = array<i64: 3, 3>, scalar_prefetch = 0 : i64, scratch_operands = 3 : i64, tpu.core_type = #tpu.core_type<tc>, window_params = [{transform_indices = @transform_0, window_bounds = array<i64: 1, 1>}, {transform_indices = @transform_1, window_bounds = array<i64: 128, 128>}, {transform_indices = @transform_2, window_bounds = array<i64: 128, 128>}, {transform_indices = @transform_3, window_bounds = array<i64: 128, 1>}, {transform_indices = @transform_4, window_bounds = array<i64: 128, 1>}, {transform_indices = @transform_5, window_bounds = array<i64: 1, 1, 128>}, {transform_indices = @transform_6, window_bounds = array<i64: 1, 1, 128>}]} {
    %c0 = arith.constant 0 : index
    %c0_0 = arith.constant 0 : index
    %0 = memref.load %arg2[%c0, %c0_0] : memref<1x1xf32, #tpu.memory_space<smem>>
    %c0_i32 = arith.constant 0 : i32
    %1 = arith.cmpi eq, %arg1, %c0_i32 : i32
    %2 = arith.extui %1 : i1 to i32
    %c0_i32_1 = arith.constant 0 : i32
    %3 = arith.cmpi ne, %2, %c0_i32_1 : i32
    scf.if %3 {
      %cst_41 = arith.constant 0xFF800000 : f32
      %71 = vector.broadcast %cst_41 : f32 to vector<128x1xf32>
      %c0_42 = arith.constant 0 : index
      %c0_43 = arith.constant 0 : index
      %72 = vector.load %arg9[%c0_42, %c0_43] : memref<128x1xf32, #tpu.memory_space<vmem>>, vector<128x1xf32>
      tpu.vector_store %arg9[%c0_42, %c0_43], %71 {strides = array<i32>} : memref<128x1xf32, #tpu.memory_space<vmem>>, vector<128x1xf32>,
      %cst_44 = arith.constant 0.000000e+00 : f32
      %73 = vector.broadcast %cst_44 : f32 to vector<128x1xf32>
      %c0_45 = arith.constant 0 : index
      %c0_46 = arith.constant 0 : index
      %74 = vector.load %arg10[%c0_45, %c0_46] : memref<128x1xf32, #tpu.memory_space<vmem>>, vector<128x1xf32>
      tpu.vector_store %arg10[%c0_45, %c0_46], %73 {strides = array<i32>} : memref<128x1xf32, #tpu.memory_space<vmem>>, vector<128x1xf32>,
      %cst_47 = arith.constant 0.000000e+00 : f32
      %75 = vector.broadcast %cst_47 : f32 to vector<128x1xf32>
      %c0_48 = arith.constant 0 : index
      %c0_49 = arith.constant 0 : index
      %76 = vector.load %arg6[%c0_48, %c0_49] : memref<128x1xf32, #tpu.memory_space<vmem>>, vector<128x1xf32>
      tpu.vector_store %arg6[%c0_48, %c0_49], %75 {strides = array<i32>} : memref<128x1xf32, #tpu.memory_space<vmem>>, vector<128x1xf32>,
      %cst_50 = arith.constant 1.000000e+00 : f32
      %77 = vector.broadcast %cst_50 : f32 to vector<1x128xf32>
      %c0_51 = arith.constant 0 : index
      %c0_52 = arith.constant 0 : index
      %78 = vector.load %arg11[%c0_51, %c0_52] : memref<1x128xf32, #tpu.memory_space<vmem>>, vector<1x128xf32>
      tpu.vector_store %arg11[%c0_51, %c0_52], %77 {strides = array<i32>} : memref<1x128xf32, #tpu.memory_space<vmem>>, vector<1x128xf32>,
    } else {
    }
    %c0_2 = arith.constant 0 : index
    %c0_3 = arith.constant 0 : index
    %4 = vector.load %arg3[%c0_2, %c0_3] : memref<128x128xbf16, #tpu.memory_space<vmem>>, vector<128x128xbf16>
    %c0_4 = arith.constant 0 : index
    %c0_5 = arith.constant 0 : index
    %5 = vector.load %arg4[%c0_4, %c0_5] : memref<128x128xbf16, #tpu.memory_space<vmem>>, vector<128x128xbf16>
    %cst = arith.constant dense<0.000000e+00> : vector<128x128xf32>
    %6 = tpu.matmul %4, %5, %cst {dimension_numbers = #tpu.dot_dimension_numbers<[1], [1], [0], [0], [0, 0, 1, 0], [], []>} : vector<128x128xbf16>, vector<128x128xbf16>, vector<128x128xf32> -> vector<128x128xf32>
    %7 = vector.broadcast %0 : f32 to vector<128x128xf32>
    %8 = arith.mulf %6, %7 : vector<128x128xf32>
    %c128_i32 = arith.constant 128 : i32
    %9 = arith.muli %arg1, %c128_i32 : i32
    %10 = tpu.iota {dimensions = array<i32: 1>} : vector<128x128xi32>
    %11 = vector.broadcast %9 : i32 to vector<128x128xi32>
    %12 = arith.addi %11, %10 : vector<128x128xi32>
    %c128_i32_6 = arith.constant 128 : i32
    %13 = arith.muli %arg0, %c128_i32_6 : i32
    %14 = tpu.iota {dimensions = array<i32: 0>} : vector<128x128xi32>
    %15 = vector.broadcast %13 : i32 to vector<128x128xi32>
    %16 = arith.addi %15, %14 : vector<128x128xi32>
    %c300_i32 = arith.constant 300 : i32
    %17 = vector.broadcast %c300_i32 : i32 to vector<128x128xi32>
    %18 = arith.cmpi slt, %12, %17 : vector<128x128xi32>
    %cst_7 = arith.constant 0xFF800000 : f32
    %19 = vector.broadcast %cst_7 : f32 to vector<128x128xf32>
    %20 = arith.select %18, %8, %19 : vector<128x128xi1>, vector<128x128xf32>
    %c300_i32_8 = arith.constant 300 : i32
    %21 = vector.broadcast %c300_i32_8 : i32 to vector<128x128xi32>
    %22 = arith.cmpi slt, %16, %21 : vector<128x128xi32>
    %cst_9 = arith.constant 0xFF800000 : f32
    %23 = vector.broadcast %cst_9 : f32 to vector<128x128xf32>
    %24 = arith.select %22, %8, %23 : vector<128x128xi1>, vector<128x128xf32>
    %cst_10 = arith.constant dense<0xFF800000> : vector<128xf32>
    %25 = vector.multi_reduction <maximumf>, %20, %cst_10 [1] : vector<128x128xf32> to vector<128xf32>
    %26 = vector.shape_cast %25 : vector<128xf32> to vector<128x1xf32>
    %c0_11 = arith.constant 0 : index
    %c0_12 = arith.constant 0 : index
    %27 = vector.load %arg9[%c0_11, %c0_12] : memref<128x1xf32, #tpu.memory_space<vmem>>, vector<128x1xf32>
    %28 = arith.maximumf %27, %26 : vector<128x1xf32>
    %29 = vector.broadcast %28 : vector<128x1xf32> to vector<128x128xf32>
    %30 = arith.subf %20, %29 : vector<128x128xf32>
    %31 = math.exp %30 : vector<128x128xf32>
    %c0_13 = arith.constant 0 : index
    %c0_14 = arith.constant 0 : index
    %32 = vector.load %arg10[%c0_13, %c0_14] : memref<128x1xf32, #tpu.memory_space<vmem>>, vector<128x1xf32>
    %c0_15 = arith.constant 0 : index
    %c0_16 = arith.constant 0 : index
    %33 = vector.load %arg9[%c0_15, %c0_16] : memref<128x1xf32, #tpu.memory_space<vmem>>, vector<128x1xf32>
    %34 = arith.subf %33, %28 : vector<128x1xf32>
    %35 = math.exp %34 : vector<128x1xf32>
    %36 = arith.mulf %32, %35 : vector<128x1xf32>
    %cst_17 = arith.constant dense<0.000000e+00> : vector<128xf32>
    %37 = vector.multi_reduction <add>, %31, %cst_17 [1] : vector<128x128xf32> to vector<128xf32>
    %38 = vector.shape_cast %37 : vector<128xf32> to vector<128x1xf32>
    %39 = arith.addf %36, %38 : vector<128x1xf32>
    %c0_18 = arith.constant 0 : index
    %c0_19 = arith.constant 0 : index
    %40 = vector.load %arg10[%c0_18, %c0_19] : memref<128x1xf32, #tpu.memory_space<vmem>>, vector<128x1xf32>
    tpu.vector_store %arg10[%c0_18, %c0_19], %39 {strides = array<i32>} : memref<128x1xf32, #tpu.memory_space<vmem>>, vector<128x1xf32>,
    %c0_20 = arith.constant 0 : index
    %c0_21 = arith.constant 0 : index
    %41 = vector.load %arg9[%c0_20, %c0_21] : memref<128x1xf32, #tpu.memory_space<vmem>>, vector<128x1xf32>
    tpu.vector_store %arg9[%c0_20, %c0_21], %28 {strides = array<i32>} : memref<128x1xf32, #tpu.memory_space<vmem>>, vector<128x1xf32>,
    %cst_22 = arith.constant dense<0xFF800000> : vector<128xf32>
    %42 = vector.multi_reduction <maximumf>, %24, %cst_22 [0] : vector<128x128xf32> to vector<128xf32>
    %43 = vector.shape_cast %42 : vector<128xf32> to vector<1x128xf32>
    %cst_23 = arith.constant 0xFF800000 : f32
    %44 = vector.broadcast %cst_23 : f32 to vector<1x128xf32>
    %45 = arith.cmpf oeq, %43, %44 : vector<1x128xf32>
    %cst_24 = arith.constant 0.000000e+00 : f32
    %46 = vector.broadcast %cst_24 : f32 to vector<1x128xf32>
    %47 = arith.select %45, %46, %43 : vector<1x128xi1>, vector<1x128xf32>
    %48 = vector.broadcast %47 : vector<1x128xf32> to vector<128x128xf32>
    %49 = arith.subf %24, %48 : vector<128x128xf32>
    %50 = math.exp %49 : vector<128x128xf32>
    %c0_25 = arith.constant 0 : index
    %c0_26 = arith.constant 0 : index
    %51 = vector.load %arg11[%c0_25, %c0_26] : memref<1x128xf32, #tpu.memory_space<vmem>>, vector<1x128xf32>
    %cst_27 = arith.constant dense<0.000000e+00> : vector<1x128xf32>
    %52 = tpu.matmul %51, %50, %cst_27 {dimension_numbers = #tpu.dot_dimension_numbers<[1], [0], [0], [1], [0, 0, 1, 1], [], []>} : vector<1x128xf32>, vector<128x128xf32>, vector<1x128xf32> -> vector<1x128xf32>
    %53 = vector.shape_cast %43 : vector<1x128xf32> to vector<1x1x128xf32>
    %c0_28 = arith.constant 0 : index
    %c0_29 = arith.constant 0 : index
    %c0_30 = arith.constant 0 : index
    %54 = vector.load %arg7[%c0_28, %c0_29, %c0_30] : memref<1x1x128xf32, #tpu.memory_space<vmem>>, vector<1x1x128xf32>
    tpu.vector_store %arg7[%c0_28, %c0_29, %c0_30], %53 {strides = array<i32>} : memref<1x1x128xf32, #tpu.memory_space<vmem>>, vector<1x1x128xf32>,
    %55 = vector.shape_cast %52 : vector<1x128xf32> to vector<1x1x128xf32>
    %c0_31 = arith.constant 0 : index
    %c0_32 = arith.constant 0 : index
    %c0_33 = arith.constant 0 : index
    %56 = vector.load %arg8[%c0_31, %c0_32, %c0_33] : memref<1x1x128xf32, #tpu.memory_space<vmem>>, vector<1x1x128xf32>
    tpu.vector_store %arg8[%c0_31, %c0_32, %c0_33], %55 {strides = array<i32>} : memref<1x1x128xf32, #tpu.memory_space<vmem>>, vector<1x1x128xf32>,
    %c128_i32_34 = arith.constant 128 : i32
    %57 = arith.muli %arg0, %c128_i32_34 : i32
    %c1_i32 = arith.constant 1 : i32
    %58 = arith.addi %arg1, %c1_i32 : i32
    %c128_i32_35 = arith.constant 128 : i32
    %59 = arith.muli %58, %c128_i32_35 : i32
    %60 = arith.cmpi slt, %57, %59 : i32
    %c128_i32_36 = arith.constant 128 : i32
    %61 = arith.muli %arg1, %c128_i32_36 : i32
    %c1_i32_37 = arith.constant 1 : i32
    %62 = arith.addi %arg0, %c1_i32_37 : i32
    %c128_i32_38 = arith.constant 128 : i32
    %63 = arith.muli %62, %c128_i32_38 : i32
    %64 = arith.cmpi slt, %61, %63 : i32
    %65 = arith.andi %60, %64 : i1
    %66 = arith.extui %65 : i1 to i32
    %c0_i32_39 = arith.constant 0 : i32
    %67 = arith.cmpi ne, %66, %c0_i32_39 : i32
    scf.if %67 {
      %c128_i32_41 = arith.constant 128 : i32
      %71 = arith.muli %arg0, %c128_i32_41 : i32
      %72 = tpu.iota {dimensions = array<i32: 0>} : vector<128x128xi32>
      %73 = vector.broadcast %71 : i32 to vector<128x128xi32>
      %74 = arith.addi %73, %72 : vector<128x128xi32>
      %c128_i32_42 = arith.constant 128 : i32
      %75 = arith.muli %arg1, %c128_i32_42 : i32
      %76 = tpu.iota {dimensions = array<i32: 1>} : vector<128x128xi32>
      %77 = vector.broadcast %75 : i32 to vector<128x128xi32>
      %78 = arith.addi %77, %76 : vector<128x128xi32>
      %c0_43 = arith.constant 0 : index
      %c0_44 = arith.constant 0 : index
      %79 = vector.load %arg6[%c0_43, %c0_44] : memref<128x1xf32, #tpu.memory_space<vmem>>, vector<128x1xf32>
      %80 = arith.cmpi eq, %74, %78 : vector<128x128xi32>
      %cst_45 = arith.constant 0.000000e+00 : f32
      %81 = vector.broadcast %cst_45 : f32 to vector<128x128xf32>
      %82 = arith.select %80, %8, %81 : vector<128x128xi1>, vector<128x128xf32>
      %cst_46 = arith.constant dense<0.000000e+00> : vector<128xf32>
      %83 = vector.multi_reduction <add>, %82, %cst_46 [1] : vector<128x128xf32> to vector<128xf32>
      %84 = vector.shape_cast %83 : vector<128xf32> to vector<128x1xf32>
      %85 = arith.addf %79, %84 : vector<128x1xf32>
      %c0_47 = arith.constant 0 : index
      %c0_48 = arith.constant 0 : index
      %86 = vector.load %arg6[%c0_47, %c0_48] : memref<128x1xf32, #tpu.memory_space<vmem>>, vector<128x1xf32>
      tpu.vector_store %arg6[%c0_47, %c0_48], %85 {strides = array<i32>} : memref<128x1xf32, #tpu.memory_space<vmem>>, vector<128x1xf32>,
    } else {
    }
    %c2_i32 = arith.constant 2 : i32
    %68 = arith.cmpi eq, %arg1, %c2_i32 : i32
    %69 = arith.extui %68 : i1 to i32
    %c0_i32_40 = arith.constant 0 : i32
    %70 = arith.cmpi ne, %69, %c0_i32_40 : i32
    scf.if %70 {
      %c0_41 = arith.constant 0 : index
      %c0_42 = arith.constant 0 : index
      %71 = vector.load %arg9[%c0_41, %c0_42] : memref<128x1xf32, #tpu.memory_space<vmem>>, vector<128x1xf32>
      %c0_43 = arith.constant 0 : index
      %c0_44 = arith.constant 0 : index
      %72 = vector.load %arg10[%c0_43, %c0_44] : memref<128x1xf32, #tpu.memory_space<vmem>>, vector<128x1xf32>
      %73 = math.log %72 : vector<128x1xf32>
      %74 = arith.addf %71, %73 : vector<128x1xf32>
      %c0_45 = arith.constant 0 : index
      %c0_46 = arith.constant 0 : index
      %75 = vector.load %arg5[%c0_45, %c0_46] : memref<128x1xf32, #tpu.memory_space<vmem>>, vector<128x1xf32>
      tpu.vector_store %arg5[%c0_45, %c0_46], %74 {strides = array<i32>} : memref<128x1xf32, #tpu.memory_space<vmem>>, vector<128x1xf32>,
    } else {
    }
    return
  }
  func.func @transform_0(%arg0: i32, %arg1: i32) -> (i32, i32) {
    %c0_i32 = arith.constant 0 : i32
    %c0_i32_0 = arith.constant 0 : i32
    %c0_i32_1 = arith.constant 0 : i32
    return %c0_i32, %c0_i32_0 : i32, i32
  }
  func.func @transform_1(%arg0: i32, %arg1: i32) -> (i32, i32) {
    %c0_i32 = arith.constant 0 : i32
    %c0_i32_0 = arith.constant 0 : i32
    return %arg0, %c0_i32 : i32, i32
  }
  func.func @transform_2(%arg0: i32, %arg1: i32) -> (i32, i32) {
    %c0_i32 = arith.constant 0 : i32
    %c0_i32_0 = arith.constant 0 : i32
    return %arg1, %c0_i32 : i32, i32
  }
  func.func @transform_3(%arg0: i32, %arg1: i32) -> (i32, i32) {
    %c0_i32 = arith.constant 0 : i32
    %c0_i32_0 = arith.constant 0 : i32
    return %arg0, %c0_i32 : i32, i32
  }
  func.func @transform_4(%arg0: i32, %arg1: i32) -> (i32, i32) {
    %c0_i32 = arith.constant 0 : i32
    %c0_i32_0 = arith.constant 0 : i32
    return %arg0, %c0_i32 : i32, i32
  }
  func.func @transform_5(%arg0: i32, %arg1: i32) -> (i32, i32, i32) {
    %c0_i32 = arith.constant 0 : i32
    %c0_i32_0 = arith.constant 0 : i32
    return %arg0, %c0_i32, %arg1 : i32, i32, i32
  }
  func.func @transform_6(%arg0: i32, %arg1: i32) -> (i32, i32, i32) {
    %c0_i32 = arith.constant 0 : i32
    %c0_i32_0 = arith.constant 0 : i32
    return %arg0, %c0_i32, %arg1 : i32, i32, i32
  }
}

</mosaic_0001>

<llo_original>
// kernel: tpu_custom_call.1
$region0: #{tpu_custom_call.1}
  #allocation0 [shape = 'u32[]', space=smem, size = 0x4, offset = 0x4, fixed_abs, tag = 'smem constant byte address 0x4 - core index']
  #allocation1 [shape = 'u32[144,128]{1,0:T(1,128)}', space=vmem, size = 0x12000, scoped, tag = 'internal scratch']
  #allocation2 [shape = 'f32[128,1]{1,0:T(8,128)}', space=vmem, size = 0x10000, scoped, tag = 'scratch operand']
  #allocation3 [shape = 'f32[128,1]{1,0:T(8,128)}', space=vmem, size = 0x10000, scoped, tag = 'scratch operand']
  #allocation4 [shape = 'f32[1,128]{1,0:T(1,128)}', space=vmem, size = 0x200, scoped, tag = 'scratch operand']
  #allocation5 [shape = 'f32[1,1]{1,0:T(1,128)S(6)}', space=smem, size = 0x200, scoped, tag = 'scoped memory for tpu_custom_call.1']
  %s0 = inlined_call_operand.<no memory space> [shape: f32[1,1], index: 0, kind: input, shape index: {}]
  %s1 = inlined_call_operand.hbm [shape: bf16[384,128], index: 1, kind: input, shape index: {}]
  %s2 = inlined_call_operand.hbm [shape: bf16[384,128], index: 2, kind: input, shape index: {}]
  %s3 = inlined_call_operand.vmem [shape: f32[384,1], index: 3, kind: output, shape index: {0}]
  %s4 = inlined_call_operand.vmem [shape: f32[384,1], index: 4, kind: output, shape index: {1}]
  %s5 = inlined_call_operand.hbm [shape: f32[3,1,384], index: 5, kind: output, shape index: {2}]
  %s6 = inlined_call_operand.hbm [shape: f32[3,1,384], index: 6, kind: output, shape index: {3}]
  %7 = xla_tuple %s3, %s4, %s5, %s6
  %s8 = sld [smem:[#allocation0]]
  $region89: #{tpu_custom_call.1} parent=0
    _
  %s10 = ssub.s32 1, %s8
  %s11 = scalar_select 0, %s10, %s8
  %12 = sst [smem:[#allocation5]] %s0
  $region1: #{tpu_custom_call.1} parent=0
    #allocation6 [shape = 'u8[65536]{0}', space=vmem, size = 0x10000, scoped, tag = 'input window, operand 1']
    #allocation7 [shape = 's32[2]{0}', space=sflag, size = 0x8, scoped, tag = 'scoped memory for tpu_custom_call.1']
    #allocation8 [shape = 's32[2]{0}', space=sflag, size = 0x8, scoped, tag = 'scoped memory for tpu_custom_call.1']
    #allocation9 [shape = 'u8[65536]{0}', space=vmem, size = 0x10000, scoped, tag = 'input window, operand 2']
    #allocation10 [shape = 's32[2]{0}', space=sflag, size = 0x8, scoped, tag = 'scoped memory for tpu_custom_call.1']
    #allocation11 [shape = 'u8[1024]{0}', space=vmem, size = 0x400, scoped, tag = 'output window, operand 2']
    #allocation12 [shape = 'u8[1024]{0}', space=vmem, size = 0x400, scoped, tag = 'output window, operand 3']
    #allocation13 [shape = 's32[2]{0}', space=sflag, size = 0x8, scoped, tag = 'scoped memory for tpu_custom_call.1']
    %13 = vsyncpa [#allocation7], 0
    %s14 = scalar_lea.sflag [#allocation7], 1
    %15 = vsyncpa %s14, 0
    %16 = vsyncpa [#allocation10], 0
    %s17 = scalar_lea.sflag [#allocation10], 1
    %18 = vsyncpa %s17, 0
    %19 = vsyncpa [#allocation8], 0
    %s20 = scalar_lea.sflag [#allocation8], 1
    %21 = vsyncpa %s20, 0
    %22 = vsyncpa [#allocation13], 0
    %s23 = scalar_lea.sflag [#allocation13], 1
    %24 = vsyncpa %s23, 0
    loop: start=0, step=1, limit=11
    $region2: #{tpu_custom_call.1} parent=1 // loop_pre_header
      _
    $region3: #{tpu_custom_call.1} parent=1 // loop_header
      %s26 = sphi 0, %s30
      %p27 = scmp.ge.s32.totalorder %s26, 11
      %s33 = sphi 0, %s45
      %s34 = sphi 0, %s41
      %s35 = sphi 0, %s33
      %s36 = sphi 0, %s34
      %s37 = sphi 0, %s35
      %s38 = sphi 0, %s36
      %s46 = sphi 0, %s46
      %s48 = sphi 0, %s46
      %s49 = sphi 0, %s48
      %s63 = sphi 0, %s49
      %s69 = sphi 0, %s71
      %s72 = sphi 0, %s69
      %s73 = sphi 0, %s72
      %s89 = sphi 0, %s73
      %s95 = sphi 0, %s97
      %s98 = sphi 0, %s95
      %s99 = sphi 0, %s98
      %s115 = sphi 0, %s99
      %s121 = sphi 0, %s123
      %s124 = sphi 0, %s121
      %s125 = sphi 0, %s124
      %s141 = sphi 0, %s125
      %s147 = sphi 0, %s149
      %s150 = sphi 0, %s147
      %s151 = sphi 0, %s150
      %s167 = sphi 0, %s151
      %s175 = sphi 0, %s177
      %s178 = sphi 0, %s175
      %s179 = sphi 0, %s178
      %s195 = sphi 0, %s179
      %s203 = sphi 0, %s205
      %s206 = sphi 0, %s203
      %s207 = sphi 0, %s206
      %s223 = sphi 0, %s207
    $region4: #{tpu_custom_call.1} parent=1 // loop_header_branch
      %29 = sbr.rel (%p27) target = $region8
    $region5: #{tpu_custom_call.1} parent=1 // loop_body
      %s31 = ssub.s32 %s26, 1
      %s32 = ssub.s32 %s26, 2
      %s39 = sadd.s32 1, %s34
      %p40 = scmp.ge.s32.totalorder %s39, 3
      %s41 = scalar_select %p40, 0, %s39
      %s42 = sadd.s32 1, %s33
      %s43 = scalar_select %p40, %s42, %s33
      %p44 = scmp.ge.s32.totalorder %s43, 3
      %s45 = scalar_select %p44, 0, %s43
      %s47 = sadd.s32 %s46, 1
      %p50 = scmp.eq.s32.totalorder %s26, 8
      %p51 = scmp.ne.s32.totalorder %s46, %s48
      %p52 = scmp.eq.s32.totalorder %s26, 0
      %p53 = por %p51, %p52
      %p54 = scmp.ne.s32.totalorder %s46, %s48
      %p55 = scmp.eq.s32.totalorder %s31, 8
      %p56 = por %p54, %p55
      %p57 = scmp.ne.s32.totalorder %s48, %s49
      %p58 = scmp.eq.s32.totalorder %s31, 0
      %p59 = por %p57, %p58
      %p60 = scmp.ne.s32.totalorder %s48, %s49
      %p61 = scmp.eq.s32.totalorder %s32, 8
      %p62 = por %p60, %p61
      %p64 = scmp.ne.s32.totalorder %s49, %s63
      %p65 = scmp.eq.s32.totalorder %s32, 0
      %p66 = por %p64, %p65
      %s67 = ssub.s32 %s33, %s45
      %p68 = scmp.eq.s32.totalorder %s67, 0
      %s70 = sadd.s32 %s69, 1
      %s71 = scalar_select %p68, %s69, %s70
      %p74 = pneg %p68
      %p75 = scmp.eq.s32.totalorder %s26, 8
      %p76 = por %p74, %p75
      %p77 = scmp.ne.s32.totalorder %s69, %s72
      %p78 = scmp.eq.s32.totalorder %s26, 0
      %p79 = por %p77, %p78
      %p80 = scmp.ne.s32.totalorder %s69, %s72
      %p81 = scmp.eq.s32.totalorder %s31, 8
      %p82 = por %p80, %p81
      %p83 = scmp.ne.s32.totalorder %s72, %s73
      %p84 = scmp.eq.s32.totalorder %s31, 0
      %p85 = por %p83, %p84
      %p86 = scmp.ne.s32.totalorder %s72, %s73
      %p87 = scmp.eq.s32.totalorder %s32, 8
      %p88 = por %p86, %p87
      %p90 = scmp.ne.s32.totalorder %s73, %s89
      %p91 = scmp.eq.s32.totalorder %s32, 0
      %p92 = por %p90, %p91
      %s93 = ssub.s32 %s34, %s41
      %p94 = scmp.eq.s32.totalorder %s93, 0
      %s96 = sadd.s32 %s95, 1
      %s97 = scalar_select %p94, %s95, %s96
      %p100 = pneg %p94
      %p101 = scmp.eq.s32.totalorder %s26, 8
      %p102 = por %p100, %p101
      %p103 = scmp.ne.s32.totalorder %s95, %s98
      %p104 = scmp.eq.s32.totalorder %s26, 0
      %p105 = por %p103, %p104
      %p106 = scmp.ne.s32.totalorder %s95, %s98
      %p107 = scmp.eq.s32.totalorder %s31, 8
      %p108 = por %p106, %p107
      %p109 = scmp.ne.s32.totalorder %s98, %s99
      %p110 = scmp.eq.s32.totalorder %s31, 0
      %p111 = por %p109, %p110
      %p112 = scmp.ne.s32.totalorder %s98, %s99
      %p113 = scmp.eq.s32.totalorder %s32, 8
      %p114 = por %p112, %p113
      %p116 = scmp.ne.s32.totalorder %s99, %s115
      %p117 = scmp.eq.s32.totalorder %s32, 0
      %p118 = por %p116, %p117
      %s119 = ssub.s32 %s33, %s45
      %p120 = scmp.eq.s32.totalorder %s119, 0
      %s122 = sadd.s32 %s121, 1
      %s123 = scalar_select %p120, %s121, %s122
      %p126 = pneg %p120
      %p127 = scmp.eq.s32.totalorder %s26, 8
      %p128 = por %p126, %p127
      %p129 = scmp.ne.s32.totalorder %s121, %s124
      %p130 = scmp.eq.s32.totalorder %s26, 0
      %p131 = por %p129, %p130
      %p132 = scmp.ne.s32.totalorder %s121, %s124
      %p133 = scmp.eq.s32.totalorder %s31, 8
      %p134 = por %p132, %p133
      %p135 = scmp.ne.s32.totalorder %s124, %s125
      %p136 = scmp.eq.s32.totalorder %s31, 0
      %p137 = por %p135, %p136
      %p138 = scmp.ne.s32.totalorder %s124, %s125
      %p139 = scmp.eq.s32.totalorder %s32, 8
      %p140 = por %p138, %p139
      %p142 = scmp.ne.s32.totalorder %s125, %s141
      %p143 = scmp.eq.s32.totalorder %s32, 0
      %p144 = por %p142, %p143
      %s145 = ssub.s32 %s33, %s45
      %p146 = scmp.eq.s32.totalorder %s145, 0
      %s148 = sadd.s32 %s147, 1
      %s149 = scalar_select %p146, %s147, %s148
      %p152 = pneg %p146
      %p153 = scmp.eq.s32.totalorder %s26, 8
      %p154 = por %p152, %p153
      %p155 = scmp.ne.s32.totalorder %s147, %s150
      %p156 = scmp.eq.s32.totalorder %s26, 0
      %p157 = por %p155, %p156
      %p158 = scmp.ne.s32.totalorder %s147, %s150
      %p159 = scmp.eq.s32.totalorder %s31, 8
      %p160 = por %p158, %p159
      %p161 = scmp.ne.s32.totalorder %s150, %s151
      %p162 = scmp.eq.s32.totalorder %s31, 0
      %p163 = por %p161, %p162
      %p164 = scmp.ne.s32.totalorder %s150, %s151
      %p165 = scmp.eq.s32.totalorder %s32, 8
      %p166 = por %p164, %p165
      %p168 = scmp.ne.s32.totalorder %s151, %s167
      %p169 = scmp.eq.s32.totalorder %s32, 0
      %p170 = por %p168, %p169
      %s171 = ssub.s32 %s33, %s45
      %s172 = ssub.s32 %s34, %s41
      %s173 = sor.u32 %s171, %s172
      %p174 = scmp.eq.s32.totalorder %s173, 0
      %s176 = sadd.s32 %s175, 1
      %s177 = scalar_select %p174, %s175, %s176
      %p180 = pneg %p174
      %p181 = scmp.eq.s32.totalorder %s26, 8
      %p182 = por %p180, %p181
      %p183 = scmp.ne.s32.totalorder %s175, %s178
      %p184 = scmp.eq.s32.totalorder %s26, 0
      %p185 = por %p183, %p184
      %p186 = scmp.ne.s32.totalorder %s175, %s178
      %p187 = scmp.eq.s32.totalorder %s31, 8
      %p188 = por %p186, %p187
      %p189 = scmp.ne.s32.totalorder %s178, %s179
      %p190 = scmp.eq.s32.totalorder %s31, 0
      %p191 = por %p189, %p190
      %p192 = scmp.ne.s32.totalorder %s178, %s179
      %p193 = scmp.eq.s32.totalorder %s32, 8
      %p194 = por %p192, %p193
      %p196 = scmp.ne.s32.totalorder %s179, %s195
      %p197 = scmp.eq.s32.totalorder %s32, 0
      %p198 = por %p196, %p197
      %s199 = ssub.s32 %s33, %s45
      %s200 = ssub.s32 %s34, %s41
      %s201 = sor.u32 %s199, %s200
      %p202 = scmp.eq.s32.totalorder %s201, 0
      %s204 = sadd.s32 %s203, 1
      %s205 = scalar_select %p202, %s203, %s204
      %p208 = pneg %p202
      %p209 = scmp.eq.s32.totalorder %s26, 8
      %p210 = por %p208, %p209
      %p211 = scmp.ne.s32.totalorder %s203, %s206
      %p212 = scmp.eq.s32.totalorder %s26, 0
      %p213 = por %p211, %p212
      %p214 = scmp.ne.s32.totalorder %s203, %s206
      %p215 = scmp.eq.s32.totalorder %s31, 8
      %p216 = por %p214, %p215
      %p217 = scmp.ne.s32.totalorder %s206, %s207
      %p218 = scmp.eq.s32.totalorder %s31, 0
      %p219 = por %p217, %p218
      %p220 = scmp.ne.s32.totalorder %s206, %s207
      %p221 = scmp.eq.s32.totalorder %s32, 8
      %p222 = por %p220, %p221
      %p224 = scmp.ne.s32.totalorder %s207, %s223
      %p225 = scmp.eq.s32.totalorder %s32, 0
      %p226 = por %p224, %p225
      %p227 = scmp.le.s32.totalorder 1, %s26
      %p228 = scmp.lt.s32.totalorder %s26, 10
      %p229 = pnand %p227, %p228
      %p230 = pneg %p229
      // Predicated region
      $region9: #{tpu_custom_call.1} parent=5 // pred_check
        _
      $region10: #{tpu_custom_call.1} parent=5 // pred_check_branch
        %232 = sbr.rel (%p229) target = $region12
      $region11: #{tpu_custom_call.1} parent=5 // pred_region
        %s233 = ssub.s32 %s26, 1
        // Predicated region
        $region13: #{tpu_custom_call.1} parent=11 // pred_check
          %p234 = pneg %p59
        $region14: #{tpu_custom_call.1} parent=11 // pred_check_branch
          %236 = sbr.rel (%p234) target = $region16
        $region15: #{tpu_custom_call.1} parent=11 // pred_region
          _
        $region16: #{tpu_custom_call.1} parent=11 // pred_fallthru
          _
      $region12: #{tpu_custom_call.1} parent=5 // pred_fallthru
        _
      %p237 = scmp.lt.s32.totalorder %s26, 9
      // Predicated region
      $region17: #{tpu_custom_call.1} parent=5 // pred_check
        %p238 = pneg %p237
      $region18: #{tpu_custom_call.1} parent=5 // pred_check_branch
        %240 = sbr.rel (%p238) target = $region20
      $region19: #{tpu_custom_call.1} parent=5 // pred_region
        // Predicated region
        $region21: #{tpu_custom_call.1} parent=19 // pred_check
          %p241 = pneg %p79
        $region22: #{tpu_custom_call.1} parent=19 // pred_check_branch
          %243 = sbr.rel (%p241) target = $region24
        $region23: #{tpu_custom_call.1} parent=19 // pred_region
          %s244 = sand.u32 %s69, 1
          %s245 = scalar_lea.sflag [#allocation7], %s244
          %s246 = sand.u32 %s69, 1
          %s247 = smul.addr %s246, 64
          %s248 = scalar_lea.vmem [#allocation6], %s247
          %s249 = smul.u32 16, %s33
          %s251 = ssub.s32 1024, 1024
          %252 = vsyncadd %s245, %s251
          %s253 = smul.addr %s249, 64
          %s254 = scalar_lea.hbm %s1, %s253
          %s255 = sshll.u32 %s248, 4
          %s256 = int_to_ptr.vmem [resolvable:$true] %s255
          %261 = dma.hbm_to_vmem [thread:$0]  %s254, 1024, %s256, %s245, 64, 64, 4
        $region24: #{tpu_custom_call.1} parent=19 // pred_fallthru
          _
        // Predicated region
        $region25: #{tpu_custom_call.1} parent=19 // pred_check
          %p262 = pneg %p105
        $region26: #{tpu_custom_call.1} parent=19 // pred_check_branch
          %264 = sbr.rel (%p262) target = $region28
        $region27: #{tpu_custom_call.1} parent=19 // pred_region
          %s265 = sand.u32 %s95, 1
          %s266 = scalar_lea.sflag [#allocation10], %s265
          %s267 = sand.u32 %s95, 1
          %s268 = smul.addr %s267, 64
          %s269 = scalar_lea.vmem [#allocation9], %s268
          %s270 = smul.u32 16, %s34
          %s272 = ssub.s32 1024, 1024
          %273 = vsyncadd %s266, %s272
          %s274 = smul.addr %s270, 64
          %s275 = scalar_lea.hbm %s2, %s274
          %s276 = sshll.u32 %s269, 4
          %s277 = int_to_ptr.vmem [resolvable:$true] %s276
          %282 = dma.hbm_to_vmem [thread:$0]  %s275, 1024, %s277, %s266, 64, 64, 4
        $region28: #{tpu_custom_call.1} parent=19 // pred_fallthru
          _
      $region20: #{tpu_custom_call.1} parent=5 // pred_fallthru
        _
      %p283 = scmp.le.s32.totalorder 1, %s26
      %p284 = scmp.lt.s32.totalorder %s26, 10
      %p285 = pnand %p283, %p284
      %p286 = pneg %p285
      // Predicated region
      $region29: #{tpu_custom_call.1} parent=5 // pred_check
        _
      $region30: #{tpu_custom_call.1} parent=5 // pred_check_branch
        %288 = sbr.rel (%p285) target = $region32
      $region31: #{tpu_custom_call.1} parent=5 // pred_region
        %s289 = ssub.s32 %s26, 1
        %s290 = sand.u32 %s72, 1
        %s291 = scalar_lea.sflag [#allocation7], %s290
        %s292 = sand.u32 %s72, 1
        %s293 = smul.addr %s292, 64
        %s294 = scalar_lea.vmem [#allocation6], %s293
        // Predicated region
        $region33: #{tpu_custom_call.1} parent=31 // pred_check
          %p295 = pneg %p85
        $region34: #{tpu_custom_call.1} parent=31 // pred_check_branch
          %297 = sbr.rel (%p295) target = $region36
        $region35: #{tpu_custom_call.1} parent=31 // pred_region
          %298 = dma.done %s291, 1024
        $region36: #{tpu_custom_call.1} parent=31 // pred_fallthru
          _
        %s299 = sand.u32 %s98, 1
        %s300 = scalar_lea.sflag [#allocation10], %s299
        %s301 = sand.u32 %s98, 1
        %s302 = smul.addr %s301, 64
        %s303 = scalar_lea.vmem [#allocation9], %s302
        // Predicated region
        $region37: #{tpu_custom_call.1} parent=31 // pred_check
          %p304 = pneg %p111
        $region38: #{tpu_custom_call.1} parent=31 // pred_check_branch
          %306 = sbr.rel (%p304) target = $region40
        $region39: #{tpu_custom_call.1} parent=31 // pred_region
          %307 = dma.done %s300, 1024
        $region40: #{tpu_custom_call.1} parent=31 // pred_fallthru
          _
        %p308 = pneg %p59
        %p309 = pneg %p56
        %s310 = sand.u32 %s72, 1
        %s311 = scalar_lea.sflag [#allocation7], %s310
        %s312 = sand.u32 %s72, 1
        %s313 = smul.addr %s312, 64
        %s314 = scalar_lea.vmem [#allocation6], %s313
        %p315 = pneg %p85
        %p316 = pneg %p82
        %s317 = sand.u32 %s98, 1
        %s318 = scalar_lea.sflag [#allocation10], %s317
        %s319 = sand.u32 %s98, 1
        %s320 = smul.addr %s319, 64
        %s321 = scalar_lea.vmem [#allocation9], %s320
        %p322 = pneg %p111
        %p323 = pneg %p108
        %p324 = pneg %p137
        %p325 = pneg %p134
        %s326 = smul.u32 16, %s35
        %p327 = scmp.lt.s32.totalorder %s326, 47
        %s328 = scalar_select %p327, %s326, 47
        %s329 = smul.addr %s328, 8
        %s330 = scalar_lea.vmem %s3, %s329
        %p331 = pneg %p163
        %p332 = pneg %p160
        %s333 = smul.u32 16, %s35
        %p334 = scmp.lt.s32.totalorder %s333, 47
        %s335 = scalar_select %p334, %s333, 47
        %s336 = smul.addr %s335, 8
        %s337 = scalar_lea.vmem %s4, %s336
        %p338 = pneg %p191
        %p339 = pneg %p188
        %s340 = sand.u32 %s178, 1
        %s341 = scalar_lea.sflag [#allocation8], %s340
        %s342 = sand.u32 %s178, 1
        %s343 = scalar_lea.vmem [#allocation11], %s342
        %p344 = pneg %p219
        %p345 = pneg %p216
        %s346 = sand.u32 %s206, 1
        %s347 = scalar_lea.sflag [#allocation13], %s346
        %s348 = sand.u32 %s206, 1
        %s349 = scalar_lea.vmem [#allocation12], %s348
        %s350 = smul.u32 16, %s35
        %s351 = smul.u32 16, %s36
        %s352 = smul.u32 16, %s35
        %p353 = scmp.lt.s32.totalorder %s352, 47
        %s354 = scalar_select %p353, %s352, 47
        %s355 = smul.addr %s354, 8
        %s356 = scalar_lea.vmem %s3, %s355
        %s357 = smul.u32 16, %s35
        %s358 = smul.u32 16, %s35
        %p359 = scmp.lt.s32.totalorder %s358, 47
        %s360 = scalar_select %p359, %s358, 47
        %s361 = smul.addr %s360, 8
        %s362 = scalar_lea.vmem %s4, %s361
        %s363 = smul.u32 16, %s35
        %s365 = sld [smem:[#allocation5]]
        %p366 = scmp.eq.s32.totalorder %s36, 0
        // Predicated region
        $region41: #{tpu_custom_call.1} parent=31 // pred_check
          %p367 = pneg %p366
        $region42: #{tpu_custom_call.1} parent=31 // pred_check_branch
          %369 = sbr.rel (%p367) target = $region44
        $region43: #{tpu_custom_call.1} parent=31 // pred_region
          %vm370 = vcmask 7168
          %371 = vst.msk [vmem:[#allocation2] sm:$0xff] %vm370, -inf
          %372 = vst.msk [vmem:[#allocation2 + $0x8] sm:$0xff] %vm370, -inf
          %373 = vst.msk [vmem:[#allocation2 + $0x10] sm:$0xff] %vm370, -inf
          %374 = vst.msk [vmem:[#allocation2 + $0x18] sm:$0xff] %vm370, -inf
          %375 = vst.msk [vmem:[#allocation2 + $0x20] sm:$0xff] %vm370, -inf
          %376 = vst.msk [vmem:[#allocation2 + $0x28] sm:$0xff] %vm370, -inf
          %377 = vst.msk [vmem:[#allocation2 + $0x30] sm:$0xff] %vm370, -inf
          %378 = vst.msk [vmem:[#allocation2 + $0x38] sm:$0xff] %vm370, -inf
          %379 = vst.msk [vmem:[#allocation2 + $0x40] sm:$0xff] %vm370, -inf
          %380 = vst.msk [vmem:[#allocation2 + $0x48] sm:$0xff] %vm370, -inf
          %381 = vst.msk [vmem:[#allocation2 + $0x50] sm:$0xff] %vm370, -inf
          %382 = vst.msk [vmem:[#allocation2 + $0x58] sm:$0xff] %vm370, -inf
          %383 = vst.msk [vmem:[#allocation2 + $0x60] sm:$0xff] %vm370, -inf
          %384 = vst.msk [vmem:[#allocation2 + $0x68] sm:$0xff] %vm370, -inf
          %385 = vst.msk [vmem:[#allocation2 + $0x70] sm:$0xff] %vm370, -inf
          %386 = vst.msk [vmem:[#allocation2 + $0x78] sm:$0xff] %vm370, -inf
          %387 = vst.msk [vmem:[#allocation3] sm:$0xff] %vm370, 0.0
          %388 = vst.msk [vmem:[#allocation3 + $0x8] sm:$0xff] %vm370, 0.0
          %389 = vst.msk [vmem:[#allocation3 + $0x10] sm:$0xff] %vm370, 0.0
          %390 = vst.msk [vmem:[#allocation3 + $0x18] sm:$0xff] %vm370, 0.0
          %391 = vst.msk [vmem:[#allocation3 + $0x20] sm:$0xff] %vm370, 0.0
          %392 = vst.msk [vmem:[#allocation3 + $0x28] sm:$0xff] %vm370, 0.0
          %393 = vst.msk [vmem:[#allocation3 + $0x30] sm:$0xff] %vm370, 0.0
          %394 = vst.msk [vmem:[#allocation3 + $0x38] sm:$0xff] %vm370, 0.0
          %395 = vst.msk [vmem:[#allocation3 + $0x40] sm:$0xff] %vm370, 0.0
          %396 = vst.msk [vmem:[#allocation3 + $0x48] sm:$0xff] %vm370, 0.0
          %397 = vst.msk [vmem:[#allocation3 + $0x50] sm:$0xff] %vm370, 0.0
          %398 = vst.msk [vmem:[#allocation3 + $0x58] sm:$0xff] %vm370, 0.0
          %399 = vst.msk [vmem:[#allocation3 + $0x60] sm:$0xff] %vm370, 0.0
          %400 = vst.msk [vmem:[#allocation3 + $0x68] sm:$0xff] %vm370, 0.0
          %401 = vst.msk [vmem:[#allocation3 + $0x70] sm:$0xff] %vm370, 0.0
          %402 = vst.msk [vmem:[#allocation3 + $0x78] sm:$0xff] %vm370, 0.0
          %403 = vst.msk [vmem:[%s362] sm:$0xff] %vm370, 0.0
          %404 = vst.msk [vmem:[%s362 + $0x8] sm:$0xff] %vm370, 0.0
          %405 = vst.msk [vmem:[%s362 + $0x10] sm:$0xff] %vm370, 0.0
          %406 = vst.msk [vmem:[%s362 + $0x18] sm:$0xff] %vm370, 0.0
          %407 = vst.msk [vmem:[%s362 + $0x20] sm:$0xff] %vm370, 0.0
          %408 = vst.msk [vmem:[%s362 + $0x28] sm:$0xff] %vm370, 0.0
          %409 = vst.msk [vmem:[%s362 + $0x30] sm:$0xff] %vm370, 0.0
          %410 = vst.msk [vmem:[%s362 + $0x38] sm:$0xff] %vm370, 0.0
          %411 = vst.msk [vmem:[%s362 + $0x40] sm:$0xff] %vm370, 0.0
          %412 = vst.msk [vmem:[%s362 + $0x48] sm:$0xff] %vm370, 0.0
          %413 = vst.msk [vmem:[%s362 + $0x50] sm:$0xff] %vm370, 0.0
          %414 = vst.msk [vmem:[%s362 + $0x58] sm:$0xff] %vm370, 0.0
          %415 = vst.msk [vmem:[%s362 + $0x60] sm:$0xff] %vm370, 0.0
          %416 = vst.msk [vmem:[%s362 + $0x68] sm:$0xff] %vm370, 0.0
          %417 = vst.msk [vmem:[%s362 + $0x70] sm:$0xff] %vm370, 0.0
          %418 = vst.msk [vmem:[%s362 + $0x78] sm:$0xff] %vm370, 0.0
          %419 = vst [vmem:[#allocation4] sm:$0x1] 1.0
        $region44: #{tpu_custom_call.1} parent=31 // pred_fallthru
          _
        %v420 = vld [vmem:[%s294] sm:$0xf]
        %v421 = vld [vmem:[%s294 + $0x4] sm:$0xf]
        %v422 = vld [vmem:[%s294 + $0x8] sm:$0xf]
        %v423 = vld [vmem:[%s294 + $0xc] sm:$0xf]
        %v424 = vld [vmem:[%s294 + $0x10] sm:$0xf]
        %v425 = vld [vmem:[%s294 + $0x14] sm:$0xf]
        %v426 = vld [vmem:[%s294 + $0x18] sm:$0xf]
        %v427 = vld [vmem:[%s294 + $0x1c] sm:$0xf]
        %v428 = vld [vmem:[%s294 + $0x20] sm:$0xf]
        %v429 = vld [vmem:[%s294 + $0x24] sm:$0xf]
        %v430 = vld [vmem:[%s294 + $0x28] sm:$0xf]
        %v431 = vld [vmem:[%s294 + $0x2c] sm:$0xf]
        %v432 = vld [vmem:[%s294 + $0x30] sm:$0xf]
        %v433 = vld [vmem:[%s294 + $0x34] sm:$0xf]
        %v434 = vld [vmem:[%s294 + $0x38] sm:$0xf]
        %v435 = vld [vmem:[%s294 + $0x3c] sm:$0xf]
        %v436 = vld [vmem:[%s303] sm:$0xf]
        %v437 = vld [vmem:[%s303 + $0x4] sm:$0xf]
        %v438 = vld [vmem:[%s303 + $0x8] sm:$0xf]
        %v439 = vld [vmem:[%s303 + $0xc] sm:$0xf]
        %v440 = vld [vmem:[%s303 + $0x10] sm:$0xf]
        %v441 = vld [vmem:[%s303 + $0x14] sm:$0xf]
        %v442 = vld [vmem:[%s303 + $0x18] sm:$0xf]
        %v443 = vld [vmem:[%s303 + $0x1c] sm:$0xf]
        %v444 = vld [vmem:[%s303 + $0x20] sm:$0xf]
        %v445 = vld [vmem:[%s303 + $0x24] sm:$0xf]
        %v446 = vld [vmem:[%s303 + $0x28] sm:$0xf]
        %v447 = vld [vmem:[%s303 + $0x2c] sm:$0xf]
        %v448 = vld [vmem:[%s303 + $0x30] sm:$0xf]
        %v449 = vld [vmem:[%s303 + $0x34] sm:$0xf]
        %v450 = vld [vmem:[%s303 + $0x38] sm:$0xf]
        %v451 = vld [vmem:[%s303 + $0x3c] sm:$0xf]
        %v468 = vunpack.c.l.b16 %v420
        %v469 = vunpack.c.l.b16 %v421
        %v470 = vunpack.c.l.b16 %v422
        %v471 = vunpack.c.l.b16 %v423
        %v472 = vunpack.c.l.b16 %v424
        %v473 = vunpack.c.l.b16 %v425
        %v474 = vunpack.c.l.b16 %v426
        %v475 = vunpack.c.l.b16 %v427
        %v476 = vunpack.c.l.b16 %v428
        %v477 = vunpack.c.l.b16 %v429
        %v478 = vunpack.c.l.b16 %v430
        %v479 = vunpack.c.l.b16 %v431
        %v480 = vunpack.c.l.b16 %v432
        %v481 = vunpack.c.l.b16 %v433
        %v482 = vunpack.c.l.b16 %v434
        %v483 = vunpack.c.l.b16 %v435
        %v484 = vpack.c.b16 %v469, %v468
        %v485 = vpack.c.b16 %v471, %v470
        %v486 = vpack.c.b16 %v473, %v472
        %v487 = vpack.c.b16 %v475, %v474
        %v488 = vpack.c.b16 %v477, %v476
        %v489 = vpack.c.b16 %v479, %v478
        %v490 = vpack.c.b16 %v481, %v480
        %v491 = vpack.c.b16 %v483, %v482
        %v516 = vunpack.c.l.b16 %v436
        %v517 = vunpack.c.l.b16 %v437
        %v518 = vunpack.c.l.b16 %v438
        %v519 = vunpack.c.l.b16 %v439
        %v520 = vunpack.c.l.b16 %v440
        %v521 = vunpack.c.l.b16 %v441
        %v522 = vunpack.c.l.b16 %v442
        %v523 = vunpack.c.l.b16 %v443
        %v524 = vunpack.c.l.b16 %v444
        %v525 = vunpack.c.l.b16 %v445
        %v526 = vunpack.c.l.b16 %v446
        %v527 = vunpack.c.l.b16 %v447
        %v528 = vunpack.c.l.b16 %v448
        %v529 = vunpack.c.l.b16 %v449
        %v530 = vunpack.c.l.b16 %v450
        %v531 = vunpack.c.l.b16 %v451
        %v532 = vpack.c.b16 %v517, %v516
        %v533 = vpack.c.b16 %v519, %v518
        %v534 = vpack.c.b16 %v521, %v520
        %v535 = vpack.c.b16 %v523, %v522
        %v536 = vpack.c.b16 %v525, %v524
        %v537 = vpack.c.b16 %v527, %v526
        %v538 = vpack.c.b16 %v529, %v528
        %v539 = vpack.c.b16 %v531, %v530
        %548 = vmatprep.subr.bf16.mxu0 0
        %549 = vmatpush1.bf16.xpose.msra.mxu0 %v532
        %550 = vmatprep.subr.bf16.mxu0 0
        %551 = vmatpush1.bf16.xpose.msra.mxu0 %v533
        %552 = vmatprep.subr.bf16.mxu0 0
        %553 = vmatpush1.bf16.xpose.msra.mxu0 %v534
        %554 = vmatprep.subr.bf16.mxu0 0
        %555 = vmatpush1.bf16.xpose.msra.mxu0 %v535
        %556 = vmatprep.subr.bf16.mxu0 0
        %557 = vmatpush1.bf16.xpose.msra.mxu0 %v536
        %558 = vmatprep.subr.bf16.mxu0 0
        %559 = vmatpush1.bf16.xpose.msra.mxu0 %v537
        %560 = vmatprep.subr.bf16.mxu0 0
        %561 = vmatpush1.bf16.xpose.msra.mxu0 %v538
        %562 = vmatprep.subr.bf16.mxu0 0
        %563 = vmatpush1.bf16.xpose.msra.mxu0 %v539
        %564 = vmatprep.subr.bf16.mxu0 0
        %565 = vmatpush1.bf16.xpose.msra.mxu0 0
        %566 = vmatprep.subr.bf16.mxu0 0
        %567 = vmatpush1.bf16.xpose.msra.mxu0 0
        %568 = vmatprep.subr.bf16.mxu0 0
        %569 = vmatpush1.bf16.xpose.msra.mxu0 0
        %570 = vmatprep.subr.bf16.mxu0 0
        %571 = vmatpush1.bf16.xpose.msra.mxu0 0
        %572 = vmatprep.subr.bf16.mxu0 0
        %573 = vmatpush1.bf16.xpose.msra.mxu0 0
        %574 = vmatprep.subr.bf16.mxu0 0
        %575 = vmatpush1.bf16.xpose.msra.mxu0 0
        %576 = vmatprep.subr.bf16.mxu0 0
        %577 = vmatpush1.bf16.xpose.msra.mxu0 0
        %578 = vmatprep.subr.bf16.mxu0 0
        %579 = vmatpush1.bf16.xpose.msra.mxu0 0
        %580 = vmatprep.mubr.bf16.mxu0 0
        %581 = vmatmul.mubr.bf16.gmra.mrb[0].mxu0 %v484
        %v582 = vpop.f32.mrb[0].mxu0
        %v583 = vadd.f32 0.0, %v582
        %v584 = vpop.f32.mrb[0].mxu0
        %v585 = vpop.f32.mrb[0].mxu0
        %v586 = vadd.f32 0.0, %v585
        %v587 = vpop.f32.mrb[0].mxu0
        %588 = vmatprep.mubr.bf16.mxu0 0
        %589 = vmatmul.mubr.bf16.gmra.mrb[0].mxu0 %v485
        %v590 = vpop.f32.mrb[0].mxu0
        %v591 = vadd.f32 0.0, %v590
        %v592 = vpop.f32.mrb[0].mxu0
        %v593 = vpop.f32.mrb[0].mxu0
        %v594 = vadd.f32 0.0, %v593
        %v595 = vpop.f32.mrb[0].mxu0
        %596 = vmatprep.mubr.bf16.mxu0 0
        %597 = vmatmul.mubr.bf16.gmra.mrb[0].mxu0 %v486
        %v598 = vpop.f32.mrb[0].mxu0
        %v599 = vadd.f32 0.0, %v598
        %v600 = vpop.f32.mrb[0].mxu0
        %v601 = vpop.f32.mrb[0].mxu0
        %v602 = vadd.f32 0.0, %v601
        %v603 = vpop.f32.mrb[0].mxu0
        %604 = vmatprep.mubr.bf16.mxu0 0
        %605 = vmatmul.mubr.bf16.gmra.mrb[0].mxu0 %v487
        %v606 = vpop.f32.mrb[0].mxu0
        %v607 = vadd.f32 0.0, %v606
        %v608 = vpop.f32.mrb[0].mxu0
        %v609 = vpop.f32.mrb[0].mxu0
        %v610 = vadd.f32 0.0, %v609
        %v611 = vpop.f32.mrb[0].mxu0
        %612 = vmatprep.mubr.bf16.mxu0 0
        %613 = vmatmul.mubr.bf16.gmra.mrb[0].mxu0 %v488
        %v614 = vpop.f32.mrb[0].mxu0
        %v615 = vadd.f32 0.0, %v614
        %v616 = vpop.f32.mrb[0].mxu0
        %v617 = vpop.f32.mrb[0].mxu0
        %v618 = vadd.f32 0.0, %v617
        %v619 = vpop.f32.mrb[0].mxu0
        %620 = vmatprep.mubr.bf16.mxu0 0
        %621 = vmatmul.mubr.bf16.gmra.mrb[0].mxu0 %v489
        %v622 = vpop.f32.mrb[0].mxu0
        %v623 = vadd.f32 0.0, %v622
        %v624 = vpop.f32.mrb[0].mxu0
        %v625 = vpop.f32.mrb[0].mxu0
        %v626 = vadd.f32 0.0, %v625
        %v627 = vpop.f32.mrb[0].mxu0
        %628 = vmatprep.mubr.bf16.mxu0 0
        %629 = vmatmul.mubr.bf16.gmra.mrb[0].mxu0 %v490
        %v630 = vpop.f32.mrb[0].mxu0
        %v631 = vadd.f32 0.0, %v630
        %v632 = vpop.f32.mrb[0].mxu0
        %v633 = vpop.f32.mrb[0].mxu0
        %v634 = vadd.f32 0.0, %v633
        %v635 = vpop.f32.mrb[0].mxu0
        %636 = vmatprep.mubr.bf16.mxu0 0
        %637 = vmatmul.mubr.bf16.gmra.mrb[0].mxu0 %v491
        %v638 = vpop.f32.mrb[0].mxu0
        %v639 = vadd.f32 0.0, %v638
        %v640 = vpop.f32.mrb[0].mxu0
        %v641 = vpop.f32.mrb[0].mxu0
        %v642 = vadd.f32 0.0, %v641
        %v643 = vpop.f32.mrb[0].mxu0
        %644 = vdwg.mxu0
        %v645 = vstv %s365
        %v646 = vmul.f32 %v583, %v645
        %v647 = vmul.f32 %v586, %v645
        %v648 = vmul.f32 %v591, %v645
        %v649 = vmul.f32 %v594, %v645
        %v650 = vmul.f32 %v599, %v645
        %v651 = vmul.f32 %v602, %v645
        %v652 = vmul.f32 %v607, %v645
        %v653 = vmul.f32 %v610, %v645
        %v654 = vmul.f32 %v615, %v645
        %v655 = vmul.f32 %v618, %v645
        %v656 = vmul.f32 %v623, %v645
        %v657 = vmul.f32 %v626, %v645
        %v658 = vmul.f32 %v631, %v645
        %v659 = vmul.f32 %v634, %v645
        %v660 = vmul.f32 %v639, %v645
        %v661 = vmul.f32 %v642, %v645
        %s662 = smul.u32 %s36, 128
        %v663 = vlaneseq
        %v664 = vand.u32 %v663, 127
        %v665 = vstv %s662
        %v666 = vadd.s32 %v665, %v664
        %s667 = smul.u32 %s35, 128
        %v668 = vlaneseq
        %v669 = vshrl.u32 %v668, 7
        %v670 = vadd.s32 %v669, 8
        %v671 = vadd.s32 %v669, 16
        %v672 = vadd.s32 %v669, 24
        %v673 = vadd.s32 %v669, 32
        %v674 = vadd.s32 %v669, 40
        %v675 = vadd.s32 %v669, 48
        %v676 = vadd.s32 %v669, 56
        %v677 = vadd.s32 %v669, 64
        %v678 = vadd.s32 %v669, 72
        %v679 = vadd.s32 %v669, 80
        %v680 = vadd.s32 %v669, 88
        %v681 = vadd.s32 %v669, 96
        %v682 = vadd.s32 %v669, 104
        %v683 = vadd.s32 %v669, 112
        %v684 = vadd.s32 %v669, 120
        %v685 = vstv %s667
        %v686 = vadd.s32 %v685, %v669
        %v687 = vadd.s32 %v685, %v670
        %v688 = vadd.s32 %v685, %v671
        %v689 = vadd.s32 %v685, %v672
        %v690 = vadd.s32 %v685, %v673
        %v691 = vadd.s32 %v685, %v674
        %v692 = vadd.s32 %v685, %v675
        %v693 = vadd.s32 %v685, %v676
        %v694 = vadd.s32 %v685, %v677
        %v695 = vadd.s32 %v685, %v678
        %v696 = vadd.s32 %v685, %v679
        %v697 = vadd.s32 %v685, %v680
        %v698 = vadd.s32 %v685, %v681
        %v699 = vadd.s32 %v685, %v682
        %v700 = vadd.s32 %v685, %v683
        %v701 = vadd.s32 %v685, %v684
        %vm702 = vcmp.lt.s32.totalorder %v666, 300
        %v703 = vsel %vm702, %v646, -inf
        %v704 = vsel %vm702, %v647, -inf
        %v705 = vsel %vm702, %v648, -inf
        %v706 = vsel %vm702, %v649, -inf
        %v707 = vsel %vm702, %v650, -inf
        %v708 = vsel %vm702, %v651, -inf
        %v709 = vsel %vm702, %v652, -inf
        %v710 = vsel %vm702, %v653, -inf
        %v711 = vsel %vm702, %v654, -inf
        %v712 = vsel %vm702, %v655, -inf
        %v713 = vsel %vm702, %v656, -inf
        %v714 = vsel %vm702, %v657, -inf
        %v715 = vsel %vm702, %v658, -inf
        %v716 = vsel %vm702, %v659, -inf
        %v717 = vsel %vm702, %v660, -inf
        %v718 = vsel %vm702, %v661, -inf
        %vm719 = vcmp.lt.s32.totalorder %v686, 300
        %vm720 = vcmp.lt.s32.totalorder %v687, 300
        %vm721 = vcmp.lt.s32.totalorder %v688, 300
        %vm722 = vcmp.lt.s32.totalorder %v689, 300
        %vm723 = vcmp.lt.s32.totalorder %v690, 300
        %vm724 = vcmp.lt.s32.totalorder %v691, 300
        %vm725 = vcmp.lt.s32.totalorder %v692, 300
        %vm726 = vcmp.lt.s32.totalorder %v693, 300
        %vm727 = vcmp.lt.s32.totalorder %v694, 300
        %vm728 = vcmp.lt.s32.totalorder %v695, 300
        %vm729 = vcmp.lt.s32.totalorder %v696, 300
        %vm730 = vcmp.lt.s32.totalorder %v697, 300
        %vm731 = vcmp.lt.s32.totalorder %v698, 300
        %vm732 = vcmp.lt.s32.totalorder %v699, 300
        %vm733 = vcmp.lt.s32.totalorder %v700, 300
        %vm734 = vcmp.lt.s32.totalorder %v701, 300
        %v735 = vsel %vm719, %v646, -inf
        %v736 = vsel %vm720, %v647, -inf
        %v737 = vsel %vm721, %v648, -inf
        %v738 = vsel %vm722, %v649, -inf
        %v739 = vsel %vm723, %v650, -inf
        %v740 = vsel %vm724, %v651, -inf
        %v741 = vsel %vm725, %v652, -inf
        %v742 = vsel %vm726, %v653, -inf
        %v743 = vsel %vm727, %v654, -inf
        %v744 = vsel %vm728, %v655, -inf
        %v745 = vsel %vm729, %v656, -inf
        %v746 = vsel %vm730, %v657, -inf
        %v747 = vsel %vm731, %v658, -inf
        %v748 = vsel %vm732, %v659, -inf
        %v749 = vsel %vm733, %v660, -inf
        %v750 = vsel %vm734, %v661, -inf
        %751 = vmax.xlane.f32.xlu0 %v703
        %v752 = vpop.xlane.xlu0 %751
        %753 = vmax.xlane.f32.xlu0 %v704
        %v754 = vpop.xlane.xlu0 %753
        %755 = vmax.xlane.f32.xlu0 %v705
        %v756 = vpop.xlane.xlu0 %755
        %757 = vmax.xlane.f32.xlu0 %v706
        %v758 = vpop.xlane.xlu0 %757
        %759 = vmax.xlane.f32.xlu0 %v707
        %v760 = vpop.xlane.xlu0 %759
        %761 = vmax.xlane.f32.xlu0 %v708
        %v762 = vpop.xlane.xlu0 %761
        %763 = vmax.xlane.f32.xlu0 %v709
        %v764 = vpop.xlane.xlu0 %763
        %765 = vmax.xlane.f32.xlu0 %v710
        %v766 = vpop.xlane.xlu0 %765
        %767 = vmax.xlane.f32.xlu0 %v711
        %v768 = vpop.xlane.xlu0 %767
        %769 = vmax.xlane.f32.xlu0 %v712
        %v770 = vpop.xlane.xlu0 %769
        %771 = vmax.xlane.f32.xlu0 %v713
        %v772 = vpop.xlane.xlu0 %771
        %773 = vmax.xlane.f32.xlu0 %v714
        %v774 = vpop.xlane.xlu0 %773
        %775 = vmax.xlane.f32.xlu0 %v715
        %v776 = vpop.xlane.xlu0 %775
        %777 = vmax.xlane.f32.xlu0 %v716
        %v778 = vpop.xlane.xlu0 %777
        %779 = vmax.xlane.f32.xlu0 %v717
        %v780 = vpop.xlane.xlu0 %779
        %781 = vmax.xlane.f32.xlu0 %v718
        %v782 = vpop.xlane.xlu0 %781
        %v783 = vld [vmem:[#allocation2] sm:$0xff]
        %v784 = vld [vmem:[#allocation2 + $0x8] sm:$0xff]
        %v785 = vld [vmem:[#allocation2 + $0x10] sm:$0xff]
        %v786 = vld [vmem:[#allocation2 + $0x18] sm:$0xff]
        %v787 = vld [vmem:[#allocation2 + $0x20] sm:$0xff]
        %v788 = vld [vmem:[#allocation2 + $0x28] sm:$0xff]
        %v789 = vld [vmem:[#allocation2 + $0x30] sm:$0xff]
        %v790 = vld [vmem:[#allocation2 + $0x38] sm:$0xff]
        %v791 = vld [vmem:[#allocation2 + $0x40] sm:$0xff]
        %v792 = vld [vmem:[#allocation2 + $0x48] sm:$0xff]
        %v793 = vld [vmem:[#allocation2 + $0x50] sm:$0xff]
        %v794 = vld [vmem:[#allocation2 + $0x58] sm:$0xff]
        %v795 = vld [vmem:[#allocation2 + $0x60] sm:$0xff]
        %v796 = vld [vmem:[#allocation2 + $0x68] sm:$0xff]
        %v797 = vld [vmem:[#allocation2 + $0x70] sm:$0xff]
        %v798 = vld [vmem:[#allocation2 + $0x78] sm:$0xff]
        %v799 = vmax.f32 %v783, %v752
        %v800 = vmax.f32 %v784, %v754
        %v801 = vmax.f32 %v785, %v756
        %v802 = vmax.f32 %v786, %v758
        %v803 = vmax.f32 %v787, %v760
        %v804 = vmax.f32 %v788, %v762
        %v805 = vmax.f32 %v789, %v764
        %v806 = vmax.f32 %v790, %v766
        %v807 = vmax.f32 %v791, %v768
        %v808 = vmax.f32 %v792, %v770
        %v809 = vmax.f32 %v793, %v772
        %v810 = vmax.f32 %v794, %v774
        %v811 = vmax.f32 %v795, %v776
        %v812 = vmax.f32 %v796, %v778
        %v813 = vmax.f32 %v797, %v780
        %v814 = vmax.f32 %v798, %v782
        %816 = vset.pattern.permute.xlu0 0
        %817 = vperm.xlu0 %816, %v799
        %v818 = vpop.permute.xlu0 %817
        %821 = vset.pattern.permute.xlu0 0
        %822 = vperm.xlu0 %821, %v800
        %v823 = vpop.permute.xlu0 %822
        %826 = vset.pattern.permute.xlu0 0
        %827 = vperm.xlu0 %826, %v801
        %v828 = vpop.permute.xlu0 %827
        %831 = vset.pattern.permute.xlu0 0
        %832 = vperm.xlu0 %831, %v802
        %v833 = vpop.permute.xlu0 %832
        %836 = vset.pattern.permute.xlu0 0
        %837 = vperm.xlu0 %836, %v803
        %v838 = vpop.permute.xlu0 %837
        %841 = vset.pattern.permute.xlu0 0
        %842 = vperm.xlu0 %841, %v804
        %v843 = vpop.permute.xlu0 %842
        %846 = vset.pattern.permute.xlu0 0
        %847 = vperm.xlu0 %846, %v805
        %v848 = vpop.permute.xlu0 %847
        %851 = vset.pattern.permute.xlu0 0
        %852 = vperm.xlu0 %851, %v806
        %v853 = vpop.permute.xlu0 %852
        %856 = vset.pattern.permute.xlu0 0
        %857 = vperm.xlu0 %856, %v807
        %v858 = vpop.permute.xlu0 %857
        %861 = vset.pattern.permute.xlu0 0
        %862 = vperm.xlu0 %861, %v808
        %v863 = vpop.permute.xlu0 %862
        %866 = vset.pattern.permute.xlu0 0
        %867 = vperm.xlu0 %866, %v809
        %v868 = vpop.permute.xlu0 %867
        %871 = vset.pattern.permute.xlu0 0
        %872 = vperm.xlu0 %871, %v810
        %v873 = vpop.permute.xlu0 %872
        %876 = vset.pattern.permute.xlu0 0
        %877 = vperm.xlu0 %876, %v811
        %v878 = vpop.permute.xlu0 %877
        %881 = vset.pattern.permute.xlu0 0
        %882 = vperm.xlu0 %881, %v812
        %v883 = vpop.permute.xlu0 %882
        %886 = vset.pattern.permute.xlu0 0
        %887 = vperm.xlu0 %886, %v813
        %v888 = vpop.permute.xlu0 %887
        %891 = vset.pattern.permute.xlu0 0
        %892 = vperm.xlu0 %891, %v814
        %v893 = vpop.permute.xlu0 %892
        %v895 = vsub.f32 %v703, %v818
        %v896 = vsub.f32 %v704, %v823
        %v897 = vsub.f32 %v705, %v828
        %v898 = vsub.f32 %v706, %v833
        %v899 = vsub.f32 %v707, %v838
        %v900 = vsub.f32 %v708, %v843
        %v901 = vsub.f32 %v709, %v848
        %v902 = vsub.f32 %v710, %v853
        %v903 = vsub.f32 %v711, %v858
        %v904 = vsub.f32 %v712, %v863
        %v905 = vsub.f32 %v713, %v868
        %v906 = vsub.f32 %v714, %v873
        %v907 = vsub.f32 %v715, %v878
        %v908 = vsub.f32 %v716, %v883
        %v909 = vsub.f32 %v717, %v888
        %v910 = vsub.f32 %v718, %v893
        %v911 = vmul.f32 %v895, 1.442695
        %v912 = vpow.pop %v911
        %v913 = vmul.f32 %v896, 1.442695
        %v914 = vpow.pop %v913
        %v915 = vmul.f32 %v897, 1.442695
        %v916 = vpow.pop %v915
        %v917 = vmul.f32 %v898, 1.442695
        %v918 = vpow.pop %v917
        %v919 = vmul.f32 %v899, 1.442695
        %v920 = vpow.pop %v919
        %v921 = vmul.f32 %v900, 1.442695
        %v922 = vpow.pop %v921
        %v923 = vmul.f32 %v901, 1.442695
        %v924 = vpow.pop %v923
        %v925 = vmul.f32 %v902, 1.442695
        %v926 = vpow.pop %v925
        %v927 = vmul.f32 %v903, 1.442695
        %v928 = vpow.pop %v927
        %v929 = vmul.f32 %v904, 1.442695
        %v930 = vpow.pop %v929
        %v931 = vmul.f32 %v905, 1.442695
        %v932 = vpow.pop %v931
        %v933 = vmul.f32 %v906, 1.442695
        %v934 = vpow.pop %v933
        %v935 = vmul.f32 %v907, 1.442695
        %v936 = vpow.pop %v935
        %v937 = vmul.f32 %v908, 1.442695
        %v938 = vpow.pop %v937
        %v939 = vmul.f32 %v909, 1.442695
        %v940 = vpow.pop %v939
        %v941 = vmul.f32 %v910, 1.442695
        %v942 = vpow.pop %v941
        %v943 = vld [vmem:[#allocation3] sm:$0xff]
        %v944 = vld [vmem:[#allocation3 + $0x8] sm:$0xff]
        %v945 = vld [vmem:[#allocation3 + $0x10] sm:$0xff]
        %v946 = vld [vmem:[#allocation3 + $0x18] sm:$0xff]
        %v947 = vld [vmem:[#allocation3 + $0x20] sm:$0xff]
        %v948 = vld [vmem:[#allocation3 + $0x28] sm:$0xff]
        %v949 = vld [vmem:[#allocation3 + $0x30] sm:$0xff]
        %v950 = vld [vmem:[#allocation3 + $0x38] sm:$0xff]
        %v951 = vld [vmem:[#allocation3 + $0x40] sm:$0xff]
        %v952 = vld [vmem:[#allocation3 + $0x48] sm:$0xff]
        %v953 = vld [vmem:[#allocation3 + $0x50] sm:$0xff]
        %v954 = vld [vmem:[#allocation3 + $0x58] sm:$0xff]
        %v955 = vld [vmem:[#allocation3 + $0x60] sm:$0xff]
        %v956 = vld [vmem:[#allocation3 + $0x68] sm:$0xff]
        %v957 = vld [vmem:[#allocation3 + $0x70] sm:$0xff]
        %v958 = vld [vmem:[#allocation3 + $0x78] sm:$0xff]
        %v959 = vsub.f32 %v783, %v799
        %v960 = vsub.f32 %v784, %v800
        %v961 = vsub.f32 %v785, %v801
        %v962 = vsub.f32 %v786, %v802
        %v963 = vsub.f32 %v787, %v803
        %v964 = vsub.f32 %v788, %v804
        %v965 = vsub.f32 %v789, %v805
        %v966 = vsub.f32 %v790, %v806
        %v967 = vsub.f32 %v791, %v807
        %v968 = vsub.f32 %v792, %v808
        %v969 = vsub.f32 %v793, %v809
        %v970 = vsub.f32 %v794, %v810
        %v971 = vsub.f32 %v795, %v811
        %v972 = vsub.f32 %v796, %v812
        %v973 = vsub.f32 %v797, %v813
        %v974 = vsub.f32 %v798, %v814
        %v975 = vmul.f32 %v959, 1.442695
        %v976 = vpow.pop %v975
        %v977 = vmul.f32 %v960, 1.442695
        %v978 = vpow.pop %v977
        %v979 = vmul.f32 %v961, 1.442695
        %v980 = vpow.pop %v979
        %v981 = vmul.f32 %v962, 1.442695
        %v982 = vpow.pop %v981
        %v983 = vmul.f32 %v963, 1.442695
        %v984 = vpow.pop %v983
        %v985 = vmul.f32 %v964, 1.442695
        %v986 = vpow.pop %v985
        %v987 = vmul.f32 %v965, 1.442695
        %v988 = vpow.pop %v987
        %v989 = vmul.f32 %v966, 1.442695
        %v990 = vpow.pop %v989
        %v991 = vmul.f32 %v967, 1.442695
        %v992 = vpow.pop %v991
        %v993 = vmul.f32 %v968, 1.442695
        %v994 = vpow.pop %v993
        %v995 = vmul.f32 %v969, 1.442695
        %v996 = vpow.pop %v995
        %v997 = vmul.f32 %v970, 1.442695
        %v998 = vpow.pop %v997
        %v999 = vmul.f32 %v971, 1.442695
        %v1000 = vpow.pop %v999
        %v1001 = vmul.f32 %v972, 1.442695
        %v1002 = vpow.pop %v1001
        %v1003 = vmul.f32 %v973, 1.442695
        %v1004 = vpow.pop %v1003
        %v1005 = vmul.f32 %v974, 1.442695
        %v1006 = vpow.pop %v1005
        %v1007 = vmul.f32 %v943, %v976
        %v1008 = vmul.f32 %v944, %v978
        %v1009 = vmul.f32 %v945, %v980
        %v1010 = vmul.f32 %v946, %v982
        %v1011 = vmul.f32 %v947, %v984
        %v1012 = vmul.f32 %v948, %v986
        %v1013 = vmul.f32 %v949, %v988
        %v1014 = vmul.f32 %v950, %v990
        %v1015 = vmul.f32 %v951, %v992
        %v1016 = vmul.f32 %v952, %v994
        %v1017 = vmul.f32 %v953, %v996
        %v1018 = vmul.f32 %v954, %v998
        %v1019 = vmul.f32 %v955, %v1000
        %v1020 = vmul.f32 %v956, %v1002
        %v1021 = vmul.f32 %v957, %v1004
        %v1022 = vmul.f32 %v958, %v1006
        %1023 = vadd.xlane.f32.xlu0 %v912
        %v1024 = vpop.xlane.xlu0 %1023
        %1025 = vadd.xlane.f32.xlu0 %v914
        %v1026 = vpop.xlane.xlu0 %1025
        %1027 = vadd.xlane.f32.xlu0 %v916
        %v1028 = vpop.xlane.xlu0 %1027
        %1029 = vadd.xlane.f32.xlu0 %v918
        %v1030 = vpop.xlane.xlu0 %1029
        %1031 = vadd.xlane.f32.xlu0 %v920
        %v1032 = vpop.xlane.xlu0 %1031
        %1033 = vadd.xlane.f32.xlu0 %v922
        %v1034 = vpop.xlane.xlu0 %1033
        %1035 = vadd.xlane.f32.xlu0 %v924
        %v1036 = vpop.xlane.xlu0 %1035
        %1037 = vadd.xlane.f32.xlu0 %v926
        %v1038 = vpop.xlane.xlu0 %1037
        %1039 = vadd.xlane.f32.xlu0 %v928
        %v1040 = vpop.xlane.xlu0 %1039
        %1041 = vadd.xlane.f32.xlu0 %v930
        %v1042 = vpop.xlane.xlu0 %1041
        %1043 = vadd.xlane.f32.xlu0 %v932
        %v1044 = vpop.xlane.xlu0 %1043
        %1045 = vadd.xlane.f32.xlu0 %v934
        %v1046 = vpop.xlane.xlu0 %1045
        %1047 = vadd.xlane.f32.xlu0 %v936
        %v1048 = vpop.xlane.xlu0 %1047
        %1049 = vadd.xlane.f32.xlu0 %v938
        %v1050 = vpop.xlane.xlu0 %1049
        %1051 = vadd.xlane.f32.xlu0 %v940
        %v1052 = vpop.xlane.xlu0 %1051
        %1053 = vadd.xlane.f32.xlu0 %v942
        %v1054 = vpop.xlane.xlu0 %1053
        %v1055 = vadd.f32 %v1007, %v1024
        %v1056 = vadd.f32 %v1008, %v1026
        %v1057 = vadd.f32 %v1009, %v1028
        %v1058 = vadd.f32 %v1010, %v1030
        %v1059 = vadd.f32 %v1011, %v1032
        %v1060 = vadd.f32 %v1012, %v1034
        %v1061 = vadd.f32 %v1013, %v1036
        %v1062 = vadd.f32 %v1014, %v1038
        %v1063 = vadd.f32 %v1015, %v1040
        %v1064 = vadd.f32 %v1016, %v1042
        %v1065 = vadd.f32 %v1017, %v1044
        %v1066 = vadd.f32 %v1018, %v1046
        %v1067 = vadd.f32 %v1019, %v1048
        %v1068 = vadd.f32 %v1020, %v1050
        %v1069 = vadd.f32 %v1021, %v1052
        %v1070 = vadd.f32 %v1022, %v1054
        %vm1071 = vcmask 7168
        %1072 = vst.msk [vmem:[#allocation3] sm:$0xff] %vm1071, %v1055
        %1073 = vst.msk [vmem:[#allocation3 + $0x8] sm:$0xff] %vm1071, %v1056
        %1074 = vst.msk [vmem:[#allocation3 + $0x10] sm:$0xff] %vm1071, %v1057
        %1075 = vst.msk [vmem:[#allocation3 + $0x18] sm:$0xff] %vm1071, %v1058
        %1076 = vst.msk [vmem:[#allocation3 + $0x20] sm:$0xff] %vm1071, %v1059
        %1077 = vst.msk [vmem:[#allocation3 + $0x28] sm:$0xff] %vm1071, %v1060
        %1078 = vst.msk [vmem:[#allocation3 + $0x30] sm:$0xff] %vm1071, %v1061
        %1079 = vst.msk [vmem:[#allocation3 + $0x38] sm:$0xff] %vm1071, %v1062
        %1080 = vst.msk [vmem:[#allocation3 + $0x40] sm:$0xff] %vm1071, %v1063
        %1081 = vst.msk [vmem:[#allocation3 + $0x48] sm:$0xff] %vm1071, %v1064
        %1082 = vst.msk [vmem:[#allocation3 + $0x50] sm:$0xff] %vm1071, %v1065
        %1083 = vst.msk [vmem:[#allocation3 + $0x58] sm:$0xff] %vm1071, %v1066
        %1084 = vst.msk [vmem:[#allocation3 + $0x60] sm:$0xff] %vm1071, %v1067
        %1085 = vst.msk [vmem:[#allocation3 + $0x68] sm:$0xff] %vm1071, %v1068
        %1086 = vst.msk [vmem:[#allocation3 + $0x70] sm:$0xff] %vm1071, %v1069
        %1087 = vst.msk [vmem:[#allocation3 + $0x78] sm:$0xff] %vm1071, %v1070
        %1088 = vst.msk [vmem:[#allocation2] sm:$0xff] %vm1071, %v799
        %1089 = vst.msk [vmem:[#allocation2 + $0x8] sm:$0xff] %vm1071, %v800
        %1090 = vst.msk [vmem:[#allocation2 + $0x10] sm:$0xff] %vm1071, %v801
        %1091 = vst.msk [vmem:[#allocation2 + $0x18] sm:$0xff] %vm1071, %v802
        %1092 = vst.msk [vmem:[#allocation2 + $0x20] sm:$0xff] %vm1071, %v803
        %1093 = vst.msk [vmem:[#allocation2 + $0x28] sm:$0xff] %vm1071, %v804
        %1094 = vst.msk [vmem:[#allocation2 + $0x30] sm:$0xff] %vm1071, %v805
        %1095 = vst.msk [vmem:[#allocation2 + $0x38] sm:$0xff] %vm1071, %v806
        %1096 = vst.msk [vmem:[#allocation2 + $0x40] sm:$0xff] %vm1071, %v807
        %1097 = vst.msk [vmem:[#allocation2 + $0x48] sm:$0xff] %vm1071, %v808
        %1098 = vst.msk [vmem:[#allocation2 + $0x50] sm:$0xff] %vm1071, %v809
        %1099 = vst.msk [vmem:[#allocation2 + $0x58] sm:$0xff] %vm1071, %v810
        %1100 = vst.msk [vmem:[#allocation2 + $0x60] sm:$0xff] %vm1071, %v811
        %1101 = vst.msk [vmem:[#allocation2 + $0x68] sm:$0xff] %vm1071, %v812
        %1102 = vst.msk [vmem:[#allocation2 + $0x70] sm:$0xff] %vm1071, %v813
        %1103 = vst.msk [vmem:[#allocation2 + $0x78] sm:$0xff] %vm1071, %v814
        %v1104 = vmax.f32 %v735, %v739
        %v1105 = vmax.f32 %v736, %v740
        %v1106 = vmax.f32 %v737, %v741
        %v1107 = vmax.f32 %v738, %v742
        %v1108 = vmax.f32 %v1104, %v743
        %v1109 = vmax.f32 %v1105, %v744
        %v1110 = vmax.f32 %v1106, %v745
        %v1111 = vmax.f32 %v1107, %v746
        %v1112 = vmax.f32 %v1108, %v747
        %v1113 = vmax.f32 %v1109, %v748
        %v1114 = vmax.f32 %v1110, %v749
        %v1115 = vmax.f32 %v1111, %v750
        %v1116 = vmax.f32 %v1112, %v1113
        %v1117 = vmax.f32 %v1114, %v1115
        %v1118 = vmax.f32 %v1116, %v1117
        %v1119 = vrot.slane %v1118, 4
        %v1120 = vmax.f32 %v1118, %v1119
        %v1121 = vrot.slane %v1120, 2
        %v1122 = vmax.f32 %v1120, %v1121
        %v1123 = vrot.slane %v1122, 1
        %v1124 = vmax.f32 %v1122, %v1123
        %vm1125 = vcmp.eq.f32.partialorder %v1124, -inf
        %v1126 = vsel %vm1125, 0.0, %v1124
        %v1127 = vsub.f32 %v735, %v1126
        %v1128 = vsub.f32 %v736, %v1126
        %v1129 = vsub.f32 %v737, %v1126
        %v1130 = vsub.f32 %v738, %v1126
        %v1131 = vsub.f32 %v739, %v1126
        %v1132 = vsub.f32 %v740, %v1126
        %v1133 = vsub.f32 %v741, %v1126
        %v1134 = vsub.f32 %v742, %v1126
        %v1135 = vsub.f32 %v743, %v1126
        %v1136 = vsub.f32 %v744, %v1126
        %v1137 = vsub.f32 %v745, %v1126
        %v1138 = vsub.f32 %v746, %v1126
        %v1139 = vsub.f32 %v747, %v1126
        %v1140 = vsub.f32 %v748, %v1126
        %v1141 = vsub.f32 %v749, %v1126
        %v1142 = vsub.f32 %v750, %v1126
        %v1143 = vmul.f32 %v1127, 1.442695
        %v1144 = vpow.pop %v1143
        %v1145 = vmul.f32 %v1128, 1.442695
        %v1146 = vpow.pop %v1145
        %v1147 = vmul.f32 %v1129, 1.442695
        %v1148 = vpow.pop %v1147
        %v1149 = vmul.f32 %v1130, 1.442695
        %v1150 = vpow.pop %v1149
        %v1151 = vmul.f32 %v1131, 1.442695
        %v1152 = vpow.pop %v1151
        %v1153 = vmul.f32 %v1132, 1.442695
        %v1154 = vpow.pop %v1153
        %v1155 = vmul.f32 %v1133, 1.442695
        %v1156 = vpow.pop %v1155
        %v1157 = vmul.f32 %v1134, 1.442695
        %v1158 = vpow.pop %v1157
        %v1159 = vmul.f32 %v1135, 1.442695
        %v1160 = vpow.pop %v1159
        %v1161 = vmul.f32 %v1136, 1.442695
        %v1162 = vpow.pop %v1161
        %v1163 = vmul.f32 %v1137, 1.442695
        %v1164 = vpow.pop %v1163
        %v1165 = vmul.f32 %v1138, 1.442695
        %v1166 = vpow.pop %v1165
        %v1167 = vmul.f32 %v1139, 1.442695
        %v1168 = vpow.pop %v1167
        %v1169 = vmul.f32 %v1140, 1.442695
        %v1170 = vpow.pop %v1169
        %v1171 = vmul.f32 %v1141, 1.442695
        %v1172 = vpow.pop %v1171
        %v1173 = vmul.f32 %v1142, 1.442695
        %v1174 = vpow.pop %v1173
        %v1175 = vld [vmem:[#allocation4] sm:$0x1]
        %1176 = vmatprep.subr.mxu0 0.0
        %1177 = vmatpush1.msra.mxu0 %v1144
        %1178 = vmatprep.subr.mxu0 0.0
        %1179 = vmatpush1.msra.mxu0 %v1146
        %1180 = vmatprep.subr.mxu0 0.0
        %1181 = vmatpush1.msra.mxu0 %v1148
        %1182 = vmatprep.subr.mxu0 0.0
        %1183 = vmatpush1.msra.mxu0 %v1150
        %1184 = vmatprep.subr.mxu0 0.0
        %1185 = vmatpush1.msra.mxu0 %v1152
        %1186 = vmatprep.subr.mxu0 0.0
        %1187 = vmatpush1.msra.mxu0 %v1154
        %1188 = vmatprep.subr.mxu0 0.0
        %1189 = vmatpush1.msra.mxu0 %v1156
        %1190 = vmatprep.subr.mxu0 0.0
        %1191 = vmatpush1.msra.mxu0 %v1158
        %1192 = vmatprep.subr.mxu0 0.0
        %1193 = vmatpush1.msra.mxu0 %v1160
        %1194 = vmatprep.subr.mxu0 0.0
        %1195 = vmatpush1.msra.mxu0 %v1162
        %1196 = vmatprep.subr.mxu0 0.0
        %1197 = vmatpush1.msra.mxu0 %v1164
        %1198 = vmatprep.subr.mxu0 0.0
        %1199 = vmatpush1.msra.mxu0 %v1166
        %1200 = vmatprep.subr.mxu0 0.0
        %1201 = vmatpush1.msra.mxu0 %v1168
        %1202 = vmatprep.subr.mxu0 0.0
        %1203 = vmatpush1.msra.mxu0 %v1170
        %1204 = vmatprep.subr.mxu0 0.0
        %1205 = vmatpush1.msra.mxu0 %v1172
        %1206 = vmatprep.subr.mxu0 0.0
        %1207 = vmatpush1.msra.mxu0 %v1174
        %1208 = vmatprep.subr.mxu0 0.0
        %1209 = vmatpush1.msra.mxu0 0.0
        %1210 = vmatprep.subr.mxu0 0.0
        %1211 = vmatpush1.msra.mxu0 0.0
        %1212 = vmatprep.subr.mxu0 0.0
        %1213 = vmatpush1.msra.mxu0 0.0
        %1214 = vmatprep.subr.mxu0 0.0
        %1215 = vmatpush1.msra.mxu0 0.0
        %1216 = vmatprep.subr.mxu0 0.0
        %1217 = vmatpush1.msra.mxu0 0.0
        %1218 = vmatprep.subr.mxu0 0.0
        %1219 = vmatpush1.msra.mxu0 0.0
        %1220 = vmatprep.subr.mxu0 0.0
        %1221 = vmatpush1.msra.mxu0 0.0
        %1222 = vmatprep.subr.mxu0 0.0
        %1223 = vmatpush1.msra.mxu0 0.0
        %1224 = vmatprep.subr.mxu0 0.0
        %1225 = vmatpush1.msra.mxu0 0.0
        %1226 = vmatprep.subr.mxu0 0.0
        %1227 = vmatpush1.msra.mxu0 0.0
        %1228 = vmatprep.subr.mxu0 0.0
        %1229 = vmatpush1.msra.mxu0 0.0
        %1230 = vmatprep.subr.mxu0 0.0
        %1231 = vmatpush1.msra.mxu0 0.0
        %1232 = vmatprep.subr.mxu0 0.0
        %1233 = vmatpush1.msra.mxu0 0.0
        %1234 = vmatprep.subr.mxu0 0.0
        %1235 = vmatpush1.msra.mxu0 0.0
        %1236 = vmatprep.subr.mxu0 0.0
        %1237 = vmatpush1.msra.mxu0 0.0
        %1238 = vmatprep.subr.mxu0 0.0
        %1239 = vmatpush1.msra.mxu0 0.0
        %1240 = vmatprep.mubr.f32.mxu0 0.0
        %1241 = vmatmul.mubr.f32.gmra.mrb[0].mxu0 %v1175
        %v1242 = vpop.f32.mrb[0].mxu0
        %v1243 = vadd.f32 0.0, %v1242
        %v1244 = vpop.f32.mrb[0].mxu0
        %1245 = vdwg.mxu0
        %1246 = vst [vmem:[%s343] sm:$0x1] %v1124
        %1247 = vst [vmem:[%s349] sm:$0x1] %v1243
        %s1248 = sadd.s32 %s36, 1
        %s1249 = smul.u32 %s1248, 128
        %p1250 = scmp.lt.s32.totalorder %s667, %s1249
        %s1251 = sadd.s32 %s35, 1
        %s1252 = smul.u32 %s1251, 128
        %p1253 = scmp.lt.s32.totalorder %s662, %s1252
        %p1254 = pnand %p1250, %p1253
        %p1255 = pneg %p1254
        // Predicated region
        $region45: #{tpu_custom_call.1} parent=31 // pred_check
          _
        $region46: #{tpu_custom_call.1} parent=31 // pred_check_branch
          %1257 = sbr.rel (%p1254) target = $region48
        $region47: #{tpu_custom_call.1} parent=31 // pred_region
          %v1258 = vld [vmem:[%s362] sm:$0xff]
          %v1259 = vld [vmem:[%s362 + $0x8] sm:$0xff]
          %v1260 = vld [vmem:[%s362 + $0x10] sm:$0xff]
          %v1261 = vld [vmem:[%s362 + $0x18] sm:$0xff]
          %v1262 = vld [vmem:[%s362 + $0x20] sm:$0xff]
          %v1263 = vld [vmem:[%s362 + $0x28] sm:$0xff]
          %v1264 = vld [vmem:[%s362 + $0x30] sm:$0xff]
          %v1265 = vld [vmem:[%s362 + $0x38] sm:$0xff]
          %v1266 = vld [vmem:[%s362 + $0x40] sm:$0xff]
          %v1267 = vld [vmem:[%s362 + $0x48] sm:$0xff]
          %v1268 = vld [vmem:[%s362 + $0x50] sm:$0xff]
          %v1269 = vld [vmem:[%s362 + $0x58] sm:$0xff]
          %v1270 = vld [vmem:[%s362 + $0x60] sm:$0xff]
          %v1271 = vld [vmem:[%s362 + $0x68] sm:$0xff]
          %v1272 = vld [vmem:[%s362 + $0x70] sm:$0xff]
          %v1273 = vld [vmem:[%s362 + $0x78] sm:$0xff]
          %vm1274 = vcmp.eq.s32.totalorder %v686, %v666
          %vm1275 = vcmp.eq.s32.totalorder %v687, %v666
          %vm1276 = vcmp.eq.s32.totalorder %v688, %v666
          %vm1277 = vcmp.eq.s32.totalorder %v689, %v666
          %vm1278 = vcmp.eq.s32.totalorder %v690, %v666
          %vm1279 = vcmp.eq.s32.totalorder %v691, %v666
          %vm1280 = vcmp.eq.s32.totalorder %v692, %v666
          %vm1281 = vcmp.eq.s32.totalorder %v693, %v666
          %vm1282 = vcmp.eq.s32.totalorder %v694, %v666
          %vm1283 = vcmp.eq.s32.totalorder %v695, %v666
          %vm1284 = vcmp.eq.s32.totalorder %v696, %v666
          %vm1285 = vcmp.eq.s32.totalorder %v697, %v666
          %vm1286 = vcmp.eq.s32.totalorder %v698, %v666
          %vm1287 = vcmp.eq.s32.totalorder %v699, %v666
          %vm1288 = vcmp.eq.s32.totalorder %v700, %v666
          %vm1289 = vcmp.eq.s32.totalorder %v701, %v666
          %v1290 = vsel %vm1274, %v646, 0.0
          %v1291 = vsel %vm1275, %v647, 0.0
          %v1292 = vsel %vm1276, %v648, 0.0
          %v1293 = vsel %vm1277, %v649, 0.0
          %v1294 = vsel %vm1278, %v650, 0.0
          %v1295 = vsel %vm1279, %v651, 0.0
          %v1296 = vsel %vm1280, %v652, 0.0
          %v1297 = vsel %vm1281, %v653, 0.0
          %v1298 = vsel %vm1282, %v654, 0.0
          %v1299 = vsel %vm1283, %v655, 0.0
          %v1300 = vsel %vm1284, %v656, 0.0
          %v1301 = vsel %vm1285, %v657, 0.0
          %v1302 = vsel %vm1286, %v658, 0.0
          %v1303 = vsel %vm1287, %v659, 0.0
          %v1304 = vsel %vm1288, %v660, 0.0
          %v1305 = vsel %vm1289, %v661, 0.0
          %1306 = vadd.xlane.f32.xlu0 %v1290
          %v1307 = vpop.xlane.xlu0 %1306
          %1308 = vadd.xlane.f32.xlu0 %v1291
          %v1309 = vpop.xlane.xlu0 %1308
          %1310 = vadd.xlane.f32.xlu0 %v1292
          %v1311 = vpop.xlane.xlu0 %1310
          %1312 = vadd.xlane.f32.xlu0 %v1293
          %v1313 = vpop.xlane.xlu0 %1312
          %1314 = vadd.xlane.f32.xlu0 %v1294
          %v1315 = vpop.xlane.xlu0 %1314
          %1316 = vadd.xlane.f32.xlu0 %v1295
          %v1317 = vpop.xlane.xlu0 %1316
          %1318 = vadd.xlane.f32.xlu0 %v1296
          %v1319 = vpop.xlane.xlu0 %1318
          %1320 = vadd.xlane.f32.xlu0 %v1297
          %v1321 = vpop.xlane.xlu0 %1320
          %1322 = vadd.xlane.f32.xlu0 %v1298
          %v1323 = vpop.xlane.xlu0 %1322
          %1324 = vadd.xlane.f32.xlu0 %v1299
          %v1325 = vpop.xlane.xlu0 %1324
          %1326 = vadd.xlane.f32.xlu0 %v1300
          %v1327 = vpop.xlane.xlu0 %1326
          %1328 = vadd.xlane.f32.xlu0 %v1301
          %v1329 = vpop.xlane.xlu0 %1328
          %1330 = vadd.xlane.f32.xlu0 %v1302
          %v1331 = vpop.xlane.xlu0 %1330
          %1332 = vadd.xlane.f32.xlu0 %v1303
          %v1333 = vpop.xlane.xlu0 %1332
          %1334 = vadd.xlane.f32.xlu0 %v1304
          %v1335 = vpop.xlane.xlu0 %1334
          %1336 = vadd.xlane.f32.xlu0 %v1305
          %v1337 = vpop.xlane.xlu0 %1336
          %v1338 = vadd.f32 %v1258, %v1307
          %v1339 = vadd.f32 %v1259, %v1309
          %v1340 = vadd.f32 %v1260, %v1311
          %v1341 = vadd.f32 %v1261, %v1313
          %v1342 = vadd.f32 %v1262, %v1315
          %v1343 = vadd.f32 %v1263, %v1317
          %v1344 = vadd.f32 %v1264, %v1319
          %v1345 = vadd.f32 %v1265, %v1321
          %v1346 = vadd.f32 %v1266, %v1323
          %v1347 = vadd.f32 %v1267, %v1325
          %v1348 = vadd.f32 %v1268, %v1327
          %v1349 = vadd.f32 %v1269, %v1329
          %v1350 = vadd.f32 %v1270, %v1331
          %v1351 = vadd.f32 %v1271, %v1333
          %v1352 = vadd.f32 %v1272, %v1335
          %v1353 = vadd.f32 %v1273, %v1337
          %1354 = vst.msk [vmem:[%s362] sm:$0xff] %vm1071, %v1338
          %1355 = vst.msk [vmem:[%s362 + $0x8] sm:$0xff] %vm1071, %v1339
          %1356 = vst.msk [vmem:[%s362 + $0x10] sm:$0xff] %vm1071, %v1340
          %1357 = vst.msk [vmem:[%s362 + $0x18] sm:$0xff] %vm1071, %v1341
          %1358 = vst.msk [vmem:[%s362 + $0x20] sm:$0xff] %vm1071, %v1342
          %1359 = vst.msk [vmem:[%s362 + $0x28] sm:$0xff] %vm1071, %v1343
          %1360 = vst.msk [vmem:[%s362 + $0x30] sm:$0xff] %vm1071, %v1344
          %1361 = vst.msk [vmem:[%s362 + $0x38] sm:$0xff] %vm1071, %v1345
          %1362 = vst.msk [vmem:[%s362 + $0x40] sm:$0xff] %vm1071, %v1346
          %1363 = vst.msk [vmem:[%s362 + $0x48] sm:$0xff] %vm1071, %v1347
          %1364 = vst.msk [vmem:[%s362 + $0x50] sm:$0xff] %vm1071, %v1348
          %1365 = vst.msk [vmem:[%s362 + $0x58] sm:$0xff] %vm1071, %v1349
          %1366 = vst.msk [vmem:[%s362 + $0x60] sm:$0xff] %vm1071, %v1350
          %1367 = vst.msk [vmem:[%s362 + $0x68] sm:$0xff] %vm1071, %v1351
          %1368 = vst.msk [vmem:[%s362 + $0x70] sm:$0xff] %vm1071, %v1352
          %1369 = vst.msk [vmem:[%s362 + $0x78] sm:$0xff] %vm1071, %v1353
        $region48: #{tpu_custom_call.1} parent=31 // pred_fallthru
          _
        %p1370 = scmp.eq.s32.totalorder %s36, 2
        // Predicated region
        $region49: #{tpu_custom_call.1} parent=31 // pred_check
          %p1371 = pneg %p1370
        $region50: #{tpu_custom_call.1} parent=31 // pred_check_branch
          %1373 = sbr.rel (%p1371) target = $region52
        $region51: #{tpu_custom_call.1} parent=31 // pred_region
          %v1374 = vld [vmem:[#allocation2] sm:$0xff]
          %v1375 = vld [vmem:[#allocation2 + $0x8] sm:$0xff]
          %v1376 = vld [vmem:[#allocation2 + $0x10] sm:$0xff]
          %v1377 = vld [vmem:[#allocation2 + $0x18] sm:$0xff]
          %v1378 = vld [vmem:[#allocation2 + $0x20] sm:$0xff]
          %v1379 = vld [vmem:[#allocation2 + $0x28] sm:$0xff]
          %v1380 = vld [vmem:[#allocation2 + $0x30] sm:$0xff]
          %v1381 = vld [vmem:[#allocation2 + $0x38] sm:$0xff]
          %v1382 = vld [vmem:[#allocation2 + $0x40] sm:$0xff]
          %v1383 = vld [vmem:[#allocation2 + $0x48] sm:$0xff]
          %v1384 = vld [vmem:[#allocation2 + $0x50] sm:$0xff]
          %v1385 = vld [vmem:[#allocation2 + $0x58] sm:$0xff]
          %v1386 = vld [vmem:[#allocation2 + $0x60] sm:$0xff]
          %v1387 = vld [vmem:[#allocation2 + $0x68] sm:$0xff]
          %v1388 = vld [vmem:[#allocation2 + $0x70] sm:$0xff]
          %v1389 = vld [vmem:[#allocation2 + $0x78] sm:$0xff]
          %v1390 = vld [vmem:[#allocation3] sm:$0xff]
          %v1391 = vld [vmem:[#allocation3 + $0x8] sm:$0xff]
          %v1392 = vld [vmem:[#allocation3 + $0x10] sm:$0xff]
          %v1393 = vld [vmem:[#allocation3 + $0x18] sm:$0xff]
          %v1394 = vld [vmem:[#allocation3 + $0x20] sm:$0xff]
          %v1395 = vld [vmem:[#allocation3 + $0x28] sm:$0xff]
          %v1396 = vld [vmem:[#allocation3 + $0x30] sm:$0xff]
          %v1397 = vld [vmem:[#allocation3 + $0x38] sm:$0xff]
          %v1398 = vld [vmem:[#allocation3 + $0x40] sm:$0xff]
          %v1399 = vld [vmem:[#allocation3 + $0x48] sm:$0xff]
          %v1400 = vld [vmem:[#allocation3 + $0x50] sm:$0xff]
          %v1401 = vld [vmem:[#allocation3 + $0x58] sm:$0xff]
          %v1402 = vld [vmem:[#allocation3 + $0x60] sm:$0xff]
          %v1403 = vld [vmem:[#allocation3 + $0x68] sm:$0xff]
          %v1404 = vld [vmem:[#allocation3 + $0x70] sm:$0xff]
          %v1405 = vld [vmem:[#allocation3 + $0x78] sm:$0xff]
          %v1406 = vlog2.pop %v1390
          %v1407 = vmul.f32 %v1406, 0.6931472
          %v1408 = vlog2.pop %v1391
          %v1409 = vmul.f32 %v1408, 0.6931472
          %v1410 = vlog2.pop %v1392
          %v1411 = vmul.f32 %v1410, 0.6931472
          %v1412 = vlog2.pop %v1393
          %v1413 = vmul.f32 %v1412, 0.6931472
          %v1414 = vlog2.pop %v1394
          %v1415 = vmul.f32 %v1414, 0.6931472
          %v1416 = vlog2.pop %v1395
          %v1417 = vmul.f32 %v1416, 0.6931472
          %v1418 = vlog2.pop %v1396
          %v1419 = vmul.f32 %v1418, 0.6931472
          %v1420 = vlog2.pop %v1397
          %v1421 = vmul.f32 %v1420, 0.6931472
          %v1422 = vlog2.pop %v1398
          %v1423 = vmul.f32 %v1422, 0.6931472
          %v1424 = vlog2.pop %v1399
          %v1425 = vmul.f32 %v1424, 0.6931472
          %v1426 = vlog2.pop %v1400
          %v1427 = vmul.f32 %v1426, 0.6931472
          %v1428 = vlog2.pop %v1401
          %v1429 = vmul.f32 %v1428, 0.6931472
          %v1430 = vlog2.pop %v1402
          %v1431 = vmul.f32 %v1430, 0.6931472
          %v1432 = vlog2.pop %v1403
          %v1433 = vmul.f32 %v1432, 0.6931472
          %v1434 = vlog2.pop %v1404
          %v1435 = vmul.f32 %v1434, 0.6931472
          %v1436 = vlog2.pop %v1405
          %v1437 = vmul.f32 %v1436, 0.6931472
          %v1438 = vadd.f32 %v1374, %v1407
          %v1439 = vadd.f32 %v1375, %v1409
          %v1440 = vadd.f32 %v1376, %v1411
          %v1441 = vadd.f32 %v1377, %v1413
          %v1442 = vadd.f32 %v1378, %v1415
          %v1443 = vadd.f32 %v1379, %v1417
          %v1444 = vadd.f32 %v1380, %v1419
          %v1445 = vadd.f32 %v1381, %v1421
          %v1446 = vadd.f32 %v1382, %v1423
          %v1447 = vadd.f32 %v1383, %v1425
          %v1448 = vadd.f32 %v1384, %v1427
          %v1449 = vadd.f32 %v1385, %v1429
          %v1450 = vadd.f32 %v1386, %v1431
          %v1451 = vadd.f32 %v1387, %v1433
          %v1452 = vadd.f32 %v1388, %v1435
          %v1453 = vadd.f32 %v1389, %v1437
          %1454 = vst.msk [vmem:[%s356] sm:$0xff] %vm1071, %v1438
          %1455 = vst.msk [vmem:[%s356 + $0x8] sm:$0xff] %vm1071, %v1439
          %1456 = vst.msk [vmem:[%s356 + $0x10] sm:$0xff] %vm1071, %v1440
          %1457 = vst.msk [vmem:[%s356 + $0x18] sm:$0xff] %vm1071, %v1441
          %1458 = vst.msk [vmem:[%s356 + $0x20] sm:$0xff] %vm1071, %v1442
          %1459 = vst.msk [vmem:[%s356 + $0x28] sm:$0xff] %vm1071, %v1443
          %1460 = vst.msk [vmem:[%s356 + $0x30] sm:$0xff] %vm1071, %v1444
          %1461 = vst.msk [vmem:[%s356 + $0x38] sm:$0xff] %vm1071, %v1445
          %1462 = vst.msk [vmem:[%s356 + $0x40] sm:$0xff] %vm1071, %v1446
          %1463 = vst.msk [vmem:[%s356 + $0x48] sm:$0xff] %vm1071, %v1447
          %1464 = vst.msk [vmem:[%s356 + $0x50] sm:$0xff] %vm1071, %v1448
          %1465 = vst.msk [vmem:[%s356 + $0x58] sm:$0xff] %vm1071, %v1449
          %1466 = vst.msk [vmem:[%s356 + $0x60] sm:$0xff] %vm1071, %v1450
          %1467 = vst.msk [vmem:[%s356 + $0x68] sm:$0xff] %vm1071, %v1451
          %1468 = vst.msk [vmem:[%s356 + $0x70] sm:$0xff] %vm1071, %v1452
          %1469 = vst.msk [vmem:[%s356 + $0x78] sm:$0xff] %vm1071, %v1453
        $region52: #{tpu_custom_call.1} parent=31 // pred_fallthru
          _
        %s1470 = smul.u32 16, %s35
        %p1471 = scmp.lt.s32.totalorder %s1470, 47
        %s1472 = scalar_select %p1471, %s1470, 47
        %s1473 = smul.addr %s1472, 8
        %s1474 = scalar_lea.vmem %s3, %s1473
        %s1475 = smul.u32 16, %s35
        %p1476 = scmp.lt.s32.totalorder %s1475, 47
        %s1477 = scalar_select %p1476, %s1475, 47
        %s1478 = smul.addr %s1477, 8
        %s1479 = scalar_lea.vmem %s4, %s1478
        %s1480 = sand.u32 %s178, 1
        %s1481 = scalar_lea.sflag [#allocation8], %s1480
        %s1482 = sand.u32 %s178, 1
        %s1483 = scalar_lea.vmem [#allocation11], %s1482
        %s1484 = sand.u32 %s206, 1
        %s1485 = scalar_lea.sflag [#allocation13], %s1484
        %s1486 = sand.u32 %s206, 1
        %s1487 = scalar_lea.vmem [#allocation12], %s1486
        // Predicated region
        $region53: #{tpu_custom_call.1} parent=31 // pred_check
          %p1488 = pneg %p134
        $region54: #{tpu_custom_call.1} parent=31 // pred_check_branch
          %1490 = sbr.rel (%p1488) target = $region56
        $region55: #{tpu_custom_call.1} parent=31 // pred_region
          %s1491 = smul.u32 16, %s35
        $region56: #{tpu_custom_call.1} parent=31 // pred_fallthru
          _
        // Predicated region
        $region57: #{tpu_custom_call.1} parent=31 // pred_check
          %p1492 = pneg %p160
        $region58: #{tpu_custom_call.1} parent=31 // pred_check_branch
          %1494 = sbr.rel (%p1492) target = $region60
        $region59: #{tpu_custom_call.1} parent=31 // pred_region
          %s1495 = smul.u32 16, %s35
        $region60: #{tpu_custom_call.1} parent=31 // pred_fallthru
          _
        // Predicated region
        $region61: #{tpu_custom_call.1} parent=31 // pred_check
          %p1496 = pneg %p188
        $region62: #{tpu_custom_call.1} parent=31 // pred_check_branch
          %1498 = sbr.rel (%p1496) target = $region64
        $region63: #{tpu_custom_call.1} parent=31 // pred_region
          %s1500 = ssub.s32 16, 16
          %1501 = vsyncadd %s1481, %s1500
          %s1502 = smul.addr %s35, 3
          %s1503 = sadd.s32 %s36, %s1502
          %s1504 = smul.addr %s1503, 16
          %s1505 = scalar_lea.hbm %s5, %s1504
          %s1507 = sshll.u32 %s1483, 4
          %s1508 = int_to_ptr.vmem [resolvable:$true] %s1507
          %1510 = dma.vmem_to_hbm [thread:$0]  %s1508, 16, %s1505, %s1481
        $region64: #{tpu_custom_call.1} parent=31 // pred_fallthru
          _
        // Predicated region
        $region65: #{tpu_custom_call.1} parent=31 // pred_check
          %p1511 = pneg %p216
        $region66: #{tpu_custom_call.1} parent=31 // pred_check_branch
          %1513 = sbr.rel (%p1511) target = $region68
        $region67: #{tpu_custom_call.1} parent=31 // pred_region
          %s1515 = ssub.s32 16, 16
          %1516 = vsyncadd %s1485, %s1515
          %s1517 = smul.addr %s35, 3
          %s1518 = sadd.s32 %s36, %s1517
          %s1519 = smul.addr %s1518, 16
          %s1520 = scalar_lea.hbm %s6, %s1519
          %s1522 = sshll.u32 %s1487, 4
          %s1523 = int_to_ptr.vmem [resolvable:$true] %s1522
          %1525 = dma.vmem_to_hbm [thread:$0]  %s1523, 16, %s1520, %s1485
        $region68: #{tpu_custom_call.1} parent=31 // pred_fallthru
          _
      $region32: #{tpu_custom_call.1} parent=5 // pred_fallthru
        _
      %p1526 = scmp.le.s32.totalorder 2, %s26
      // Predicated region
      $region69: #{tpu_custom_call.1} parent=5 // pred_check
        %p1527 = pneg %p1526
      $region70: #{tpu_custom_call.1} parent=5 // pred_check_branch
        %1529 = sbr.rel (%p1527) target = $region72
      $region71: #{tpu_custom_call.1} parent=5 // pred_region
        %s1530 = ssub.s32 %s26, 2
        // Predicated region
        $region73: #{tpu_custom_call.1} parent=71 // pred_check
          %p1531 = pneg %p140
        $region74: #{tpu_custom_call.1} parent=71 // pred_check_branch
          %1533 = sbr.rel (%p1531) target = $region76
        $region75: #{tpu_custom_call.1} parent=71 // pred_region
          %s1534 = smul.u32 16, %s37
          %p1535 = scmp.lt.s32.totalorder %s1534, 47
          %s1536 = scalar_select %p1535, %s1534, 47
          %s1537 = smul.addr %s1536, 8
          %s1538 = scalar_lea.vmem %s3, %s1537
        $region76: #{tpu_custom_call.1} parent=71 // pred_fallthru
          _
        // Predicated region
        $region77: #{tpu_custom_call.1} parent=71 // pred_check
          %p1539 = pneg %p166
        $region78: #{tpu_custom_call.1} parent=71 // pred_check_branch
          %1541 = sbr.rel (%p1539) target = $region80
        $region79: #{tpu_custom_call.1} parent=71 // pred_region
          %s1542 = smul.u32 16, %s37
          %p1543 = scmp.lt.s32.totalorder %s1542, 47
          %s1544 = scalar_select %p1543, %s1542, 47
          %s1545 = smul.addr %s1544, 8
          %s1546 = scalar_lea.vmem %s4, %s1545
        $region80: #{tpu_custom_call.1} parent=71 // pred_fallthru
          _
        // Predicated region
        $region81: #{tpu_custom_call.1} parent=71 // pred_check
          %p1547 = pneg %p194
        $region82: #{tpu_custom_call.1} parent=71 // pred_check_branch
          %1549 = sbr.rel (%p1547) target = $region84
        $region83: #{tpu_custom_call.1} parent=71 // pred_region
          %s1550 = sand.u32 %s179, 1
          %s1551 = scalar_lea.sflag [#allocation8], %s1550
          %s1552 = sand.u32 %s179, 1
          %s1553 = scalar_lea.vmem [#allocation11], %s1552
          %1554 = dma.done %s1551, 16
        $region84: #{tpu_custom_call.1} parent=71 // pred_fallthru
          _
        // Predicated region
        $region85: #{tpu_custom_call.1} parent=71 // pred_check
          %p1555 = pneg %p222
        $region86: #{tpu_custom_call.1} parent=71 // pred_check_branch
          %1557 = sbr.rel (%p1555) target = $region88
        $region87: #{tpu_custom_call.1} parent=71 // pred_region
          %s1558 = sand.u32 %s207, 1
          %s1559 = scalar_lea.sflag [#allocation13], %s1558
          %s1560 = sand.u32 %s207, 1
          %s1561 = scalar_lea.vmem [#allocation12], %s1560
          %1562 = dma.done %s1559, 16
        $region88: #{tpu_custom_call.1} parent=71 // pred_fallthru
          _
      $region72: #{tpu_custom_call.1} parent=5 // pred_fallthru
        _
    $region6: #{tpu_custom_call.1} parent=1 // loop_footer
      %s30 = sadd.s32 1, %s26
    $region7: #{tpu_custom_call.1} parent=1 // loop_footer_branch
      %25 = sbr.rel target = $region3
    $region8: #{tpu_custom_call.1} parent=1 // loop_exit
      _
    %1563 = vsyncpa [#allocation7], 1
    %s1564 = scalar_lea.sflag [#allocation7], 1
    %1565 = vsyncpa %s1564, 1
    %1566 = vsyncpa [#allocation10], 1
    %s1567 = scalar_lea.sflag [#allocation10], 1
    %1568 = vsyncpa %s1567, 1
    %1569 = vsyncpa [#allocation8], 1
    %s1570 = scalar_lea.sflag [#allocation8], 1
    %1571 = vsyncpa %s1570, 1
    %1572 = vsyncpa [#allocation13], 1
    %s1573 = scalar_lea.sflag [#allocation13], 1
    %1574 = vsyncpa %s1573, 1

</llo_original>
